<compile_context>
chip_gen: v7x
topology: tpu7x:2x2x1
jax: 0.10.0
libtpu: 0.0.40
codegen_flags: <defaults>
</compile_context>

<pallas_src>
import functools

import jax
import jax.numpy as jnp
from jax.experimental import pallas as pl
from jax.experimental.pallas import tpu as pltpu

# Lane-dense padded sizes (128-lane vregs / full-width MXU passes).
KPAD = 128   # padded im2col feature dim (k*k*Cin = 27 -> 128)
CP = 128     # padded conv output channels (16 -> 128)
EP = 128     # padded embedding dim (32 -> 128)
PB = 16      # patch positions per grid step (reduction chunk)


# -----------------------------------------------------------------------------
# Fused kernel: conv stem (matmul + bias + ReLU)  ->  fc (accumulated)  ->  L2 norm
#
# Grid: one "arbitrary" reduction axis over chunks of patch positions.
#   p_ref  : (PB*N, KPAD) bf16   im2col patches for this chunk (p-major, n-minor rows)
#   cw_ref : (KPAD, CP)   bf16   conv stem weight (zero padded)
#   cb_ref : (1, CP)      f32    conv stem bias   (zero padded)
#   fw_ref : (PB, CP, EP) bf16   packed fc weight block: fw[p, c, e] = fc_w[e, c*P + p]
#   fb_ref : (1, EP)      f32    fc bias (zero padded)
#   o_ref  : (N, EP)      f32    normalized embeddings (lanes >= embed are zero)
#   acc_ref: (N, EP)      f32    VMEM accumulator, persists across the reduction axis
# -----------------------------------------------------------------------------
def _fused_img_encoder_kernel(n_img, pb,
                              p_ref, cw_ref, cb_ref, fw_ref, fb_ref,
                              o_ref, acc_ref):
    k = pl.program_id(0)

    @pl.when(k == 0)
    def _init():
        acc_ref[...] = jnp.zeros_like(acc_ref)

    # --- conv stem for this chunk: (pb*n_img, KPAD) @ (KPAD, CP) on the MXU --------
    conv = jnp.dot(p_ref[...], cw_ref[...], preferred_element_type=jnp.float32)
    conv = jnp.maximum(conv + cb_ref[...], 0.0)            # (pb*n_img, CP) f32, ReLU

    # --- fc contribution of these pb patch positions -------------------------------
    #   acc[n, e] += sum_j conv[(j, n), :] @ fw[j, :, :]
    # (plain 2-D MXU matmuls only; rows j*n_img:(j+1)*n_img are image rows of
    #  patch position j within this chunk)
    contrib = jnp.zeros(acc_ref.shape, jnp.float32)
    for j in range(pb):
        lhs = conv[j * n_img:(j + 1) * n_img, :].astype(jnp.bfloat16)   # (n_img, CP)
        contrib = contrib + jnp.dot(lhs, fw_ref[j],
                                    preferred_element_type=jnp.float32)
    acc_ref[...] += contrib

    # --- finalize: bias + row-wise L2 normalization ---------------------------------
    @pl.when(k == pl.num_programs(0) - 1)
    def _finalize():
        y = acc_ref[...] + fb_ref[...]                      # (n_img, EP) f32
        ssq = jnp.sum(y * y, axis=1, keepdims=True)         # padded lanes are 0
        # matches torch `x / x.norm(dim=1, keepdim=True)` (no epsilon; a zero row
        # would give NaN exactly like the reference).
        o_ref[...] = (y * jax.lax.rsqrt(ssq)).astype(o_ref.dtype)


# -----------------------------------------------------------------------------
# Glue: im2col (layout only, tiny) and one-time weight packing
# -----------------------------------------------------------------------------
def _conv_out_hw(h, w, k=3, stride=2, pad=1):
    return (h + 2 * pad - k) // stride + 1, (w + 2 * pad - k) // stride + 1


def _im2col_nhwc(x_nhwc, k=3, stride=2, pad=1):
    """Extract k x k patches -> (N, Ho, Wo, k*k*C) in (di, dj, c) feature order."""
    n, h, w, c = x_nhwc.shape
    xp = jnp.pad(x_nhwc, ((0, 0), (pad, pad), (pad, pad), (0, 0)))
    ho, wo = _conv_out_hw(h, w, k, stride, pad)
    cols = []
    for di in range(k):
        for dj in range(k):
            cols.append(xp[:, di:di + stride * ho:stride, dj:dj + stride * wo:stride, :])
    return jnp.concatenate(cols, axis=-1), ho, wo


def pack_params(params, *, image_hw, k=3, stride=2, pad=1):
    """One-time padding / permutation / bf16 cast of the weights (done outside jit)."""
    conv_w, conv_b = params["conv_w"], params["conv_b"]     # (k,k,Cin,Cout), (Cout,)
    fc_w, fc_b = params["fc_w"], params["fc_b"]             # (E, F) torch layout, (E,)
    ho, wo = _conv_out_hw(image_hw[0], image_hw[1], k, stride, pad)
    p_total = ho * wo
    cout = conv_w.shape[-1]
    kk_cin = conv_w.shape[0] * conv_w.shape[1] * conv_w.shape[2]
    e = fc_w.shape[0]
    assert fc_w.shape[1] == cout * p_total, "fc in_features must equal Cout*Ho*Wo"
    assert kk_cin <= KPAD and cout <= CP and e <= EP

    cw = jnp.zeros((KPAD, CP), jnp.float32).at[:kk_cin, :cout].set(
        conv_w.reshape(kk_cin, cout))
    cb = jnp.zeros((1, CP), jnp.float32).at[0, :cout].set(conv_b)

    # torch NCHW flatten: feature index f = c * (Ho*Wo) + p.  Pack as (p, c, e).
    fw = fc_w.reshape(e, cout, p_total)                     # fw[e, c, p]
    fw = jnp.transpose(fw, (2, 1, 0))                       # (p, c, e)
    fwp = jnp.zeros((p_total, CP, EP), jnp.float32).at[:, :cout, :e].set(fw)
    fbp = jnp.zeros((1, EP), jnp.float32).at[0, :e].set(fc_b)

    return {
        "conv_w": cw.astype(jnp.bfloat16),
        "conv_b": cb,
        "fc_w": fwp.astype(jnp.bfloat16),
        "fc_b": fbp,
    }


# -----------------------------------------------------------------------------
# Forward pass
# -----------------------------------------------------------------------------
def img_encoder_forward(image_nchw, packed, *, embed_size):
    n = image_nchw.shape[0]

    # im2col (layout glue).  Rows are arranged p-major / n-minor so each grid step
    # sees a contiguous (PB*N, KPAD) block covering PB patch positions of all images.
    x_nhwc = jnp.transpose(image_nchw, (0, 2, 3, 1))
    patches, ho, wo = _im2col_nhwc(x_nhwc, k=3, stride=2, pad=1)   # (N, Ho, Wo, KK)
    p_total = ho * wo
    kk = patches.shape[-1]
    patches = patches.reshape(n, p_total, kk)
    patches = jnp.transpose(patches, (1, 0, 2)).reshape(p_total * n, kk)
    patches = jnp.pad(patches, ((0, 0), (0, KPAD - kk))).astype(jnp.bfloat16)

    assert packed["fc_w"].shape[0] == p_total
    assert p_total % PB == 0 and (PB * n) % 8 == 0
    n_chunks = p_total // PB

    kernel = functools.partial(_fused_img_encoder_kernel, n, PB)

    flops = 2 * (p_total * n) * KPAD * CP + 2 * n * (p_total * CP) * EP
    bytes_accessed = (patches.size * 2 + packed["conv_w"].size * 2 +
                      packed["conv_b"].size * 4 + packed["fc_w"].size * 2 +
                      packed["fc_b"].size * 4 + n * EP * 4)

    out = pl.pallas_call(
        kernel,
        out_shape=jax.ShapeDtypeStruct((n, EP), jnp.float32),
        grid_spec=pltpu.PrefetchScalarGridSpec(
            num_scalar_prefetch=0,
            grid=(n_chunks,),
            in_specs=[
                pl.BlockSpec((PB * n, KPAD), lambda k: (k, 0)),     # patches chunk
                pl.BlockSpec((KPAD, CP), lambda k: (0, 0)),         # conv weight
                pl.BlockSpec((1, CP), lambda k: (0, 0)),            # conv bias
                pl.BlockSpec((PB, CP, EP), lambda k: (k, 0, 0)),    # fc weight chunk
                pl.BlockSpec((1, EP), lambda k: (0, 0)),            # fc bias
            ],
            out_specs=pl.BlockSpec((n, EP), lambda k: (0, 0)),      # resident output
            scratch_shapes=[pltpu.VMEM((n, EP), jnp.float32)],      # f32 accumulator
        ),
        compiler_params=pltpu.CompilerParams(
            dimension_semantics=("arbitrary",),      # reduction axis
            vmem_limit_bytes=32 * 1024 * 1024,
        ),
        cost_estimate=pl.CostEstimate(
            flops=flops, transcendentals=n, bytes_accessed=bytes_accessed),
    )(patches, packed["conv_w"], packed["conv_b"], packed["fc_w"], packed["fc_b"])

    return out[:, :embed_size]


# -----------------------------------------------------------------------------
# Parameters & pure-JAX reference (f32) for validation
# -----------------------------------------------------------------------------
def init_params(key, in_ch=3, init_ch=16, out_size=8, embed_size=32):
    k_conv_w, k_conv_b, k_fc_w, k_fc_b = jax.random.split(key, 4)
    k = 3
    in_features = init_ch * out_size * out_size
    return {
        "conv_w": 0.1 * jax.random.normal(k_conv_w, (k, k, in_ch, init_ch), jnp.float32),
        "conv_b": 0.1 * jax.random.normal(k_conv_b, (init_ch,), jnp.float32),
        "fc_w": 0.05 * jax.random.normal(k_fc_w, (embed_size, in_features), jnp.float32),
        "fc_b": 0.05 * jax.random.normal(k_fc_b, (embed_size,), jnp.float32),
    }


def _reference_forward(image_nchw, params):
    n = image_nchw.shape[0]
    x = jnp.transpose(image_nchw, (0, 2, 3, 1))
    patches, ho, wo = _im2col_nhwc(x, k=3, stride=2, pad=1)
    kk = patches.shape[-1]
    cout = params["conv_w"].shape[-1]
    conv = jnp.maximum(
        patches.reshape(-1, kk) @ params["conv_w"].reshape(kk, cout) + params["conv_b"],
        0.0)
    feat = conv.reshape(n, ho, wo, cout)
    feat = jnp.transpose(feat, (0, 3, 1, 2)).reshape(n, -1)        # NCHW flatten
    y = feat @ params["fc_w"].T + params["fc_b"]
    return y / jnp.linalg.norm(y, axis=1, keepdims=True)


if __name__ == "__main__":
    key = jax.random.PRNGKey(0)
    k_img, k_par = jax.random.split(key)

    # batch=2, 3-channel 16x16 image, init_ch=16 -> 8x8 feature map, embed_size=32
    image = jax.random.normal(k_img, (2, 3, 16, 16), jnp.float32)
    params = init_params(k_par, in_ch=3, init_ch=16, out_size=8, embed_size=32)
    packed = pack_params(params, image_hw=(16, 16))

    fwd = jax.jit(img_encoder_forward, static_argnames=("embed_size",))
    out = jax.block_until_ready(fwd(image, packed, embed_size=32))

    assert out.shape == (2, 32)
    norms = jnp.linalg.norm(out, axis=1)
    assert bool(jnp.all(jnp.abs(norms - 1.0) < 1e-3))

    ref = _reference_forward(image, params)
    assert bool(jnp.all(jnp.abs(out - ref) < 2e-2))   # bf16 matmul tolerance

    print("KERNEL_OK")
</pallas_src>

<mosaic_0001>
module attributes {stable_mosaic.version = 11 : i64} {
  func.func @_fused_img_encoder_kernel(%arg0: i32, %arg1: memref<32x128xbf16, #tpu.memory_space<vmem>>, %arg2: memref<128x128xbf16, #tpu.memory_space<vmem>>, %arg3: memref<1x128xf32, #tpu.memory_space<vmem>>, %arg4: memref<16x128x128xbf16, #tpu.memory_space<vmem>>, %arg5: memref<1x128xf32, #tpu.memory_space<vmem>>, %arg6: memref<2x128xf32, #tpu.memory_space<vmem>>, %arg7: memref<2x128xf32, #tpu.memory_space<vmem>>) attributes {dimension_semantics = [#tpu.dimension_semantics<arbitrary>], iteration_bounds = array<i64: 4>, scalar_prefetch = 0 : i64, scratch_operands = 1 : i64, tpu.core_type = #tpu.core_type<tc>, window_params = [{transform_indices = @transform_0, window_bounds = array<i64: 32, 128>}, {pipeline_mode = #tpu.pipeline_mode<synchronous>, transform_indices = @transform_1, window_bounds = array<i64: 128, 128>}, {pipeline_mode = #tpu.pipeline_mode<synchronous>, transform_indices = @transform_2, window_bounds = array<i64: 1, 128>}, {transform_indices = @transform_3, window_bounds = array<i64: 16, 128, 128>}, {pipeline_mode = #tpu.pipeline_mode<synchronous>, transform_indices = @transform_4, window_bounds = array<i64: 1, 128>}, {pipeline_mode = #tpu.pipeline_mode<synchronous>, transform_indices = @transform_5, window_bounds = array<i64: 2, 128>}]} {
    %c0_i32 = arith.constant 0 : i32
    %0 = arith.cmpi eq, %arg0, %c0_i32 : i32
    %1 = arith.extui %0 : i1 to i32
    %c0_i32_0 = arith.constant 0 : i32
    %2 = arith.cmpi ne, %1, %c0_i32_0 : i32
    scf.if %2 {
      %cst_62 = arith.constant 0.000000e+00 : f32
      %114 = vector.broadcast %cst_62 : f32 to vector<2x128xf32>
      %c0_63 = arith.constant 0 : index
      %c0_64 = arith.constant 0 : index
      %115 = vector.load %arg7[%c0_63, %c0_64] : memref<2x128xf32, #tpu.memory_space<vmem>>, vector<2x128xf32>
      tpu.vector_store %arg7[%c0_63, %c0_64], %114 {strides = array<i32>} : memref<2x128xf32, #tpu.memory_space<vmem>>, vector<2x128xf32>,
    } else {
    }
    %c0 = arith.constant 0 : index
    %c0_1 = arith.constant 0 : index
    %3 = vector.load %arg1[%c0, %c0_1] : memref<32x128xbf16, #tpu.memory_space<vmem>>, vector<32x128xbf16>
    %c0_2 = arith.constant 0 : index
    %c0_3 = arith.constant 0 : index
    %4 = vector.load %arg2[%c0_2, %c0_3] : memref<128x128xbf16, #tpu.memory_space<vmem>>, vector<128x128xbf16>
    %cst = arith.constant dense<0.000000e+00> : vector<32x128xf32>
    %5 = tpu.matmul %3, %4, %cst {dimension_numbers = #tpu.dot_dimension_numbers<[1], [0], [0], [1], [0, 0, 1, 1], [], []>} : vector<32x128xbf16>, vector<128x128xbf16>, vector<32x128xf32> -> vector<32x128xf32>
    %c0_4 = arith.constant 0 : index
    %c0_5 = arith.constant 0 : index
    %6 = vector.load %arg3[%c0_4, %c0_5] : memref<1x128xf32, #tpu.memory_space<vmem>>, vector<1x128xf32>
    %7 = vector.broadcast %6 : vector<1x128xf32> to vector<32x128xf32>
    %8 = arith.addf %5, %7 : vector<32x128xf32>
    %cst_6 = arith.constant 0.000000e+00 : f32
    %9 = vector.broadcast %cst_6 : f32 to vector<32x128xf32>
    %10 = arith.maximumf %8, %9 : vector<32x128xf32>
    %cst_7 = arith.constant 0.000000e+00 : f32
    %11 = vector.broadcast %cst_7 : f32 to vector<2x128xf32>
    %12 = vector.extract_strided_slice %10 {offsets = [0, 0], sizes = [2, 128], strides = [1, 1]} : vector<32x128xf32> to vector<2x128xf32>
    %13 = arith.truncf %12 : vector<2x128xf32> to vector<2x128xbf16>
    %c0_8 = arith.constant 0 : index
    %c0_9 = arith.constant 0 : index
    %c0_10 = arith.constant 0 : index
    %14 = vector.load %arg4[%c0_8, %c0_9, %c0_10] : memref<16x128x128xbf16, #tpu.memory_space<vmem>>, vector<1x128x128xbf16>
    %15 = vector.shape_cast %14 : vector<1x128x128xbf16> to vector<128x128xbf16>
    %cst_11 = arith.constant dense<0.000000e+00> : vector<2x128xf32>
    %16 = tpu.matmul %13, %15, %cst_11 {dimension_numbers = #tpu.dot_dimension_numbers<[1], [0], [0], [1], [0, 0, 1, 1], [], []>} : vector<2x128xbf16>, vector<128x128xbf16>, vector<2x128xf32> -> vector<2x128xf32>
    %17 = arith.addf %11, %16 : vector<2x128xf32>
    %18 = vector.extract_strided_slice %10 {offsets = [2, 0], sizes = [2, 128], strides = [1, 1]} : vector<32x128xf32> to vector<2x128xf32>
    %19 = arith.truncf %18 : vector<2x128xf32> to vector<2x128xbf16>
    %c1 = arith.constant 1 : index
    %c0_12 = arith.constant 0 : index
    %c0_13 = arith.constant 0 : index
    %20 = vector.load %arg4[%c1, %c0_12, %c0_13] : memref<16x128x128xbf16, #tpu.memory_space<vmem>>, vector<1x128x128xbf16>
    %21 = vector.shape_cast %20 : vector<1x128x128xbf16> to vector<128x128xbf16>
    %cst_14 = arith.constant dense<0.000000e+00> : vector<2x128xf32>
    %22 = tpu.matmul %19, %21, %cst_14 {dimension_numbers = #tpu.dot_dimension_numbers<[1], [0], [0], [1], [0, 0, 1, 1], [], []>} : vector<2x128xbf16>, vector<128x128xbf16>, vector<2x128xf32> -> vector<2x128xf32>
    %23 = arith.addf %17, %22 : vector<2x128xf32>
    %24 = vector.extract_strided_slice %10 {offsets = [4, 0], sizes = [2, 128], strides = [1, 1]} : vector<32x128xf32> to vector<2x128xf32>
    %25 = arith.truncf %24 : vector<2x128xf32> to vector<2x128xbf16>
    %c2 = arith.constant 2 : index
    %c0_15 = arith.constant 0 : index
    %c0_16 = arith.constant 0 : index
    %26 = vector.load %arg4[%c2, %c0_15, %c0_16] : memref<16x128x128xbf16, #tpu.memory_space<vmem>>, vector<1x128x128xbf16>
    %27 = vector.shape_cast %26 : vector<1x128x128xbf16> to vector<128x128xbf16>
    %cst_17 = arith.constant dense<0.000000e+00> : vector<2x128xf32>
    %28 = tpu.matmul %25, %27, %cst_17 {dimension_numbers = #tpu.dot_dimension_numbers<[1], [0], [0], [1], [0, 0, 1, 1], [], []>} : vector<2x128xbf16>, vector<128x128xbf16>, vector<2x128xf32> -> vector<2x128xf32>
    %29 = arith.addf %23, %28 : vector<2x128xf32>
    %30 = vector.extract_strided_slice %10 {offsets = [6, 0], sizes = [2, 128], strides = [1, 1]} : vector<32x128xf32> to vector<2x128xf32>
    %31 = arith.truncf %30 : vector<2x128xf32> to vector<2x128xbf16>
    %c3 = arith.constant 3 : index
    %c0_18 = arith.constant 0 : index
    %c0_19 = arith.constant 0 : index
    %32 = vector.load %arg4[%c3, %c0_18, %c0_19] : memref<16x128x128xbf16, #tpu.memory_space<vmem>>, vector<1x128x128xbf16>
    %33 = vector.shape_cast %32 : vector<1x128x128xbf16> to vector<128x128xbf16>
    %cst_20 = arith.constant dense<0.000000e+00> : vector<2x128xf32>
    %34 = tpu.matmul %31, %33, %cst_20 {dimension_numbers = #tpu.dot_dimension_numbers<[1], [0], [0], [1], [0, 0, 1, 1], [], []>} : vector<2x128xbf16>, vector<128x128xbf16>, vector<2x128xf32> -> vector<2x128xf32>
    %35 = arith.addf %29, %34 : vector<2x128xf32>
    %36 = vector.extract_strided_slice %10 {offsets = [8, 0], sizes = [2, 128], strides = [1, 1]} : vector<32x128xf32> to vector<2x128xf32>
    %37 = arith.truncf %36 : vector<2x128xf32> to vector<2x128xbf16>
    %c4 = arith.constant 4 : index
    %c0_21 = arith.constant 0 : index
    %c0_22 = arith.constant 0 : index
    %38 = vector.load %arg4[%c4, %c0_21, %c0_22] : memref<16x128x128xbf16, #tpu.memory_space<vmem>>, vector<1x128x128xbf16>
    %39 = vector.shape_cast %38 : vector<1x128x128xbf16> to vector<128x128xbf16>
    %cst_23 = arith.constant dense<0.000000e+00> : vector<2x128xf32>
    %40 = tpu.matmul %37, %39, %cst_23 {dimension_numbers = #tpu.dot_dimension_numbers<[1], [0], [0], [1], [0, 0, 1, 1], [], []>} : vector<2x128xbf16>, vector<128x128xbf16>, vector<2x128xf32> -> vector<2x128xf32>
    %41 = arith.addf %35, %40 : vector<2x128xf32>
    %42 = vector.extract_strided_slice %10 {offsets = [10, 0], sizes = [2, 128], strides = [1, 1]} : vector<32x128xf32> to vector<2x128xf32>
    %43 = arith.truncf %42 : vector<2x128xf32> to vector<2x128xbf16>
    %c5 = arith.constant 5 : index
    %c0_24 = arith.constant 0 : index
    %c0_25 = arith.constant 0 : index
    %44 = vector.load %arg4[%c5, %c0_24, %c0_25] : memref<16x128x128xbf16, #tpu.memory_space<vmem>>, vector<1x128x128xbf16>
    %45 = vector.shape_cast %44 : vector<1x128x128xbf16> to vector<128x128xbf16>
    %cst_26 = arith.constant dense<0.000000e+00> : vector<2x128xf32>
    %46 = tpu.matmul %43, %45, %cst_26 {dimension_numbers = #tpu.dot_dimension_numbers<[1], [0], [0], [1], [0, 0, 1, 1], [], []>} : vector<2x128xbf16>, vector<128x128xbf16>, vector<2x128xf32> -> vector<2x128xf32>
    %47 = arith.addf %41, %46 : vector<2x128xf32>
    %48 = vector.extract_strided_slice %10 {offsets = [12, 0], sizes = [2, 128], strides = [1, 1]} : vector<32x128xf32> to vector<2x128xf32>
    %49 = arith.truncf %48 : vector<2x128xf32> to vector<2x128xbf16>
    %c6 = arith.constant 6 : index
    %c0_27 = arith.constant 0 : index
    %c0_28 = arith.constant 0 : index
    %50 = vector.load %arg4[%c6, %c0_27, %c0_28] : memref<16x128x128xbf16, #tpu.memory_space<vmem>>, vector<1x128x128xbf16>
    %51 = vector.shape_cast %50 : vector<1x128x128xbf16> to vector<128x128xbf16>
    %cst_29 = arith.constant dense<0.000000e+00> : vector<2x128xf32>
    %52 = tpu.matmul %49, %51, %cst_29 {dimension_numbers = #tpu.dot_dimension_numbers<[1], [0], [0], [1], [0, 0, 1, 1], [], []>} : vector<2x128xbf16>, vector<128x128xbf16>, vector<2x128xf32> -> vector<2x128xf32>
    %53 = arith.addf %47, %52 : vector<2x128xf32>
    %54 = vector.extract_strided_slice %10 {offsets = [14, 0], sizes = [2, 128], strides = [1, 1]} : vector<32x128xf32> to vector<2x128xf32>
    %55 = arith.truncf %54 : vector<2x128xf32> to vector<2x128xbf16>
    %c7 = arith.constant 7 : index
    %c0_30 = arith.constant 0 : index
    %c0_31 = arith.constant 0 : index
    %56 = vector.load %arg4[%c7, %c0_30, %c0_31] : memref<16x128x128xbf16, #tpu.memory_space<vmem>>, vector<1x128x128xbf16>
    %57 = vector.shape_cast %56 : vector<1x128x128xbf16> to vector<128x128xbf16>
    %cst_32 = arith.constant dense<0.000000e+00> : vector<2x128xf32>
    %58 = tpu.matmul %55, %57, %cst_32 {dimension_numbers = #tpu.dot_dimension_numbers<[1], [0], [0], [1], [0, 0, 1, 1], [], []>} : vector<2x128xbf16>, vector<128x128xbf16>, vector<2x128xf32> -> vector<2x128xf32>
    %59 = arith.addf %53, %58 : vector<2x128xf32>
    %60 = vector.extract_strided_slice %10 {offsets = [16, 0], sizes = [2, 128], strides = [1, 1]} : vector<32x128xf32> to vector<2x128xf32>
    %61 = arith.truncf %60 : vector<2x128xf32> to vector<2x128xbf16>
    %c8 = arith.constant 8 : index
    %c0_33 = arith.constant 0 : index
    %c0_34 = arith.constant 0 : index
    %62 = vector.load %arg4[%c8, %c0_33, %c0_34] : memref<16x128x128xbf16, #tpu.memory_space<vmem>>, vector<1x128x128xbf16>
    %63 = vector.shape_cast %62 : vector<1x128x128xbf16> to vector<128x128xbf16>
    %cst_35 = arith.constant dense<0.000000e+00> : vector<2x128xf32>
    %64 = tpu.matmul %61, %63, %cst_35 {dimension_numbers = #tpu.dot_dimension_numbers<[1], [0], [0], [1], [0, 0, 1, 1], [], []>} : vector<2x128xbf16>, vector<128x128xbf16>, vector<2x128xf32> -> vector<2x128xf32>
    %65 = arith.addf %59, %64 : vector<2x128xf32>
    %66 = vector.extract_strided_slice %10 {offsets = [18, 0], sizes = [2, 128], strides = [1, 1]} : vector<32x128xf32> to vector<2x128xf32>
    %67 = arith.truncf %66 : vector<2x128xf32> to vector<2x128xbf16>
    %c9 = arith.constant 9 : index
    %c0_36 = arith.constant 0 : index
    %c0_37 = arith.constant 0 : index
    %68 = vector.load %arg4[%c9, %c0_36, %c0_37] : memref<16x128x128xbf16, #tpu.memory_space<vmem>>, vector<1x128x128xbf16>
    %69 = vector.shape_cast %68 : vector<1x128x128xbf16> to vector<128x128xbf16>
    %cst_38 = arith.constant dense<0.000000e+00> : vector<2x128xf32>
    %70 = tpu.matmul %67, %69, %cst_38 {dimension_numbers = #tpu.dot_dimension_numbers<[1], [0], [0], [1], [0, 0, 1, 1], [], []>} : vector<2x128xbf16>, vector<128x128xbf16>, vector<2x128xf32> -> vector<2x128xf32>
    %71 = arith.addf %65, %70 : vector<2x128xf32>
    %72 = vector.extract_strided_slice %10 {offsets = [20, 0], sizes = [2, 128], strides = [1, 1]} : vector<32x128xf32> to vector<2x128xf32>
    %73 = arith.truncf %72 : vector<2x128xf32> to vector<2x128xbf16>
    %c10 = arith.constant 10 : index
    %c0_39 = arith.constant 0 : index
    %c0_40 = arith.constant 0 : index
    %74 = vector.load %arg4[%c10, %c0_39, %c0_40] : memref<16x128x128xbf16, #tpu.memory_space<vmem>>, vector<1x128x128xbf16>
    %75 = vector.shape_cast %74 : vector<1x128x128xbf16> to vector<128x128xbf16>
    %cst_41 = arith.constant dense<0.000000e+00> : vector<2x128xf32>
    %76 = tpu.matmul %73, %75, %cst_41 {dimension_numbers = #tpu.dot_dimension_numbers<[1], [0], [0], [1], [0, 0, 1, 1], [], []>} : vector<2x128xbf16>, vector<128x128xbf16>, vector<2x128xf32> -> vector<2x128xf32>
    %77 = arith.addf %71, %76 : vector<2x128xf32>
    %78 = vector.extract_strided_slice %10 {offsets = [22, 0], sizes = [2, 128], strides = [1, 1]} : vector<32x128xf32> to vector<2x128xf32>
    %79 = arith.truncf %78 : vector<2x128xf32> to vector<2x128xbf16>
    %c11 = arith.constant 11 : index
    %c0_42 = arith.constant 0 : index
    %c0_43 = arith.constant 0 : index
    %80 = vector.load %arg4[%c11, %c0_42, %c0_43] : memref<16x128x128xbf16, #tpu.memory_space<vmem>>, vector<1x128x128xbf16>
    %81 = vector.shape_cast %80 : vector<1x128x128xbf16> to vector<128x128xbf16>
    %cst_44 = arith.constant dense<0.000000e+00> : vector<2x128xf32>
    %82 = tpu.matmul %79, %81, %cst_44 {dimension_numbers = #tpu.dot_dimension_numbers<[1], [0], [0], [1], [0, 0, 1, 1], [], []>} : vector<2x128xbf16>, vector<128x128xbf16>, vector<2x128xf32> -> vector<2x128xf32>
    %83 = arith.addf %77, %82 : vector<2x128xf32>
    %84 = vector.extract_strided_slice %10 {offsets = [24, 0], sizes = [2, 128], strides = [1, 1]} : vector<32x128xf32> to vector<2x128xf32>
    %85 = arith.truncf %84 : vector<2x128xf32> to vector<2x128xbf16>
    %c12 = arith.constant 12 : index
    %c0_45 = arith.constant 0 : index
    %c0_46 = arith.constant 0 : index
    %86 = vector.load %arg4[%c12, %c0_45, %c0_46] : memref<16x128x128xbf16, #tpu.memory_space<vmem>>, vector<1x128x128xbf16>
    %87 = vector.shape_cast %86 : vector<1x128x128xbf16> to vector<128x128xbf16>
    %cst_47 = arith.constant dense<0.000000e+00> : vector<2x128xf32>
    %88 = tpu.matmul %85, %87, %cst_47 {dimension_numbers = #tpu.dot_dimension_numbers<[1], [0], [0], [1], [0, 0, 1, 1], [], []>} : vector<2x128xbf16>, vector<128x128xbf16>, vector<2x128xf32> -> vector<2x128xf32>
    %89 = arith.addf %83, %88 : vector<2x128xf32>
    %90 = vector.extract_strided_slice %10 {offsets = [26, 0], sizes = [2, 128], strides = [1, 1]} : vector<32x128xf32> to vector<2x128xf32>
    %91 = arith.truncf %90 : vector<2x128xf32> to vector<2x128xbf16>
    %c13 = arith.constant 13 : index
    %c0_48 = arith.constant 0 : index
    %c0_49 = arith.constant 0 : index
    %92 = vector.load %arg4[%c13, %c0_48, %c0_49] : memref<16x128x128xbf16, #tpu.memory_space<vmem>>, vector<1x128x128xbf16>
    %93 = vector.shape_cast %92 : vector<1x128x128xbf16> to vector<128x128xbf16>
    %cst_50 = arith.constant dense<0.000000e+00> : vector<2x128xf32>
    %94 = tpu.matmul %91, %93, %cst_50 {dimension_numbers = #tpu.dot_dimension_numbers<[1], [0], [0], [1], [0, 0, 1, 1], [], []>} : vector<2x128xbf16>, vector<128x128xbf16>, vector<2x128xf32> -> vector<2x128xf32>
    %95 = arith.addf %89, %94 : vector<2x128xf32>
    %96 = vector.extract_strided_slice %10 {offsets = [28, 0], sizes = [2, 128], strides = [1, 1]} : vector<32x128xf32> to vector<2x128xf32>
    %97 = arith.truncf %96 : vector<2x128xf32> to vector<2x128xbf16>
    %c14 = arith.constant 14 : index
    %c0_51 = arith.constant 0 : index
    %c0_52 = arith.constant 0 : index
    %98 = vector.load %arg4[%c14, %c0_51, %c0_52] : memref<16x128x128xbf16, #tpu.memory_space<vmem>>, vector<1x128x128xbf16>
    %99 = vector.shape_cast %98 : vector<1x128x128xbf16> to vector<128x128xbf16>
    %cst_53 = arith.constant dense<0.000000e+00> : vector<2x128xf32>
    %100 = tpu.matmul %97, %99, %cst_53 {dimension_numbers = #tpu.dot_dimension_numbers<[1], [0], [0], [1], [0, 0, 1, 1], [], []>} : vector<2x128xbf16>, vector<128x128xbf16>, vector<2x128xf32> -> vector<2x128xf32>
    %101 = arith.addf %95, %100 : vector<2x128xf32>
    %102 = vector.extract_strided_slice %10 {offsets = [30, 0], sizes = [2, 128], strides = [1, 1]} : vector<32x128xf32> to vector<2x128xf32>
    %103 = arith.truncf %102 : vector<2x128xf32> to vector<2x128xbf16>
    %c15 = arith.constant 15 : index
    %c0_54 = arith.constant 0 : index
    %c0_55 = arith.constant 0 : index
    %104 = vector.load %arg4[%c15, %c0_54, %c0_55] : memref<16x128x128xbf16, #tpu.memory_space<vmem>>, vector<1x128x128xbf16>
    %105 = vector.shape_cast %104 : vector<1x128x128xbf16> to vector<128x128xbf16>
    %cst_56 = arith.constant dense<0.000000e+00> : vector<2x128xf32>
    %106 = tpu.matmul %103, %105, %cst_56 {dimension_numbers = #tpu.dot_dimension_numbers<[1], [0], [0], [1], [0, 0, 1, 1], [], []>} : vector<2x128xbf16>, vector<128x128xbf16>, vector<2x128xf32> -> vector<2x128xf32>
    %107 = arith.addf %101, %106 : vector<2x128xf32>
    %c0_57 = arith.constant 0 : index
    %c0_58 = arith.constant 0 : index
    %108 = vector.load %arg7[%c0_57, %c0_58] : memref<2x128xf32, #tpu.memory_space<vmem>>, vector<2x128xf32>
    %109 = arith.addf %108, %107 : vector<2x128xf32>
    %c0_59 = arith.constant 0 : index
    %c0_60 = arith.constant 0 : index
    %110 = vector.load %arg7[%c0_59, %c0_60] : memref<2x128xf32, #tpu.memory_space<vmem>>, vector<2x128xf32>
    tpu.vector_store %arg7[%c0_59, %c0_60], %109 {strides = array<i32>} : memref<2x128xf32, #tpu.memory_space<vmem>>, vector<2x128xf32>,
    %c3_i32 = arith.constant 3 : i32
    %111 = arith.cmpi eq, %arg0, %c3_i32 : i32
    %112 = arith.extui %111 : i1 to i32
    %c0_i32_61 = arith.constant 0 : i32
    %113 = arith.cmpi ne, %112, %c0_i32_61 : i32
    scf.if %113 {
      %c0_62 = arith.constant 0 : index
      %c0_63 = arith.constant 0 : index
      %114 = vector.load %arg7[%c0_62, %c0_63] : memref<2x128xf32, #tpu.memory_space<vmem>>, vector<2x128xf32>
      %c0_64 = arith.constant 0 : index
      %c0_65 = arith.constant 0 : index
      %115 = vector.load %arg5[%c0_64, %c0_65] : memref<1x128xf32, #tpu.memory_space<vmem>>, vector<1x128xf32>
      %116 = vector.broadcast %115 : vector<1x128xf32> to vector<2x128xf32>
      %117 = arith.addf %114, %116 : vector<2x128xf32>
      %118 = arith.mulf %117, %117 : vector<2x128xf32>
      %cst_66 = arith.constant dense<0.000000e+00> : vector<2xf32>
      %119 = vector.multi_reduction <add>, %118, %cst_66 [1] : vector<2x128xf32> to vector<2xf32>
      %120 = vector.shape_cast %119 : vector<2xf32> to vector<2x1xf32>
      %121 = math.rsqrt %120 : vector<2x1xf32>
      %122 = vector.broadcast %121 : vector<2x1xf32> to vector<2x128xf32>
      %123 = arith.mulf %117, %122 : vector<2x128xf32>
      %c0_67 = arith.constant 0 : index
      %c0_68 = arith.constant 0 : index
      %124 = vector.load %arg6[%c0_67, %c0_68] : memref<2x128xf32, #tpu.memory_space<vmem>>, vector<2x128xf32>
      tpu.vector_store %arg6[%c0_67, %c0_68], %123 {strides = array<i32>} : memref<2x128xf32, #tpu.memory_space<vmem>>, vector<2x128xf32>,
    } else {
    }
    return
  }
  func.func @transform_0(%arg0: i32) -> (i32, i32) {
    %c0_i32 = arith.constant 0 : i32
    %c0_i32_0 = arith.constant 0 : i32
    return %arg0, %c0_i32 : i32, i32
  }
  func.func @transform_1(%arg0: i32) -> (i32, i32) {
    %c0_i32 = arith.constant 0 : i32
    %c0_i32_0 = arith.constant 0 : i32
    %c0_i32_1 = arith.constant 0 : i32
    return %c0_i32, %c0_i32_0 : i32, i32
  }
  func.func @transform_2(%arg0: i32) -> (i32, i32) {
    %c0_i32 = arith.constant 0 : i32
    %c0_i32_0 = arith.constant 0 : i32
    %c0_i32_1 = arith.constant 0 : i32
    return %c0_i32, %c0_i32_0 : i32, i32
  }
  func.func @transform_3(%arg0: i32) -> (i32, i32, i32) {
    %c0_i32 = arith.constant 0 : i32
    %c0_i32_0 = arith.constant 0 : i32
    %c0_i32_1 = arith.constant 0 : i32
    return %arg0, %c0_i32, %c0_i32_0 : i32, i32, i32
  }
  func.func @transform_4(%arg0: i32) -> (i32, i32) {
    %c0_i32 = arith.constant 0 : i32
    %c0_i32_0 = arith.constant 0 : i32
    %c0_i32_1 = arith.constant 0 : i32
    return %c0_i32, %c0_i32_0 : i32, i32
  }
  func.func @transform_5(%arg0: i32) -> (i32, i32) {
    %c0_i32 = arith.constant 0 : i32
    %c0_i32_0 = arith.constant 0 : i32
    %c0_i32_1 = arith.constant 0 : i32
    return %c0_i32, %c0_i32_0 : i32, i32
  }
}

</mosaic_0001>

<llo_original>
// kernel: img_encoder_forward.1
$region0: #{img_encoder_forward.1}
  #allocation0 [shape = 'u32[]', space=smem, size = 0x4, offset = 0x4, fixed_abs, tag = 'smem constant byte address 0x4 - core index']
  #allocation1 [shape = 'u32[144,128]{1,0:T(1,128)}', space=vmem, size = 0x12000, scoped, tag = 'internal scratch']
  #allocation2 [shape = 'f32[2,128]{1,0:T(2,128)}', space=vmem, size = 0x400, scoped, tag = 'scratch operand']
  %s0 = inlined_call_operand.vmem [shape: bf16[128,128], index: 0, kind: input, shape index: {}]
  %s1 = inlined_call_operand.hbm [shape: bf16[128,128], index: 1, kind: input, shape index: {}]
  %s2 = inlined_call_operand.hbm [shape: f32[1,128], index: 2, kind: input, shape index: {}]
  %s3 = inlined_call_operand.hbm [shape: bf16[64,128,128], index: 3, kind: input, shape index: {}]
  %s4 = inlined_call_operand.hbm [shape: f32[1,128], index: 4, kind: input, shape index: {}]
  %s5 = inlined_call_operand.hbm [shape: f32[2,128], index: 5, kind: output, shape index: {}]
  %s6 = sld [smem:[#allocation0]]
  $region77: #{img_encoder_forward.1} parent=0
    _
  %s8 = ssub.s32 1, %s6
  %s9 = scalar_select 0, %s8, %s6
  $region1: #{img_encoder_forward.1} parent=0
    #allocation3 [shape = 'u8[32768]{0}', space=vmem, size = 0x8000, scoped, tag = 'input window, operand 1, single buffered']
    #allocation4 [shape = 's32[2]{0}', space=sflag, size = 0x8, scoped, tag = 'scoped memory for img_encoder_forward.1']
    #allocation5 [shape = 's32[2]{0}', space=sflag, size = 0x8, scoped, tag = 'scoped memory for img_encoder_forward.1']
    #allocation6 [shape = 'u8[512]{0}', space=vmem, size = 0x400, scoped, tag = 'input window, operand 2, single buffered']
    #allocation7 [shape = 's32[1]{0}', space=sflag, size = 0x4, scoped, tag = 'scoped memory for img_encoder_forward.1']
    #allocation8 [shape = 'u8[1048576]{0}', space=vmem, size = 0x100000, scoped, tag = 'input window, operand 3']
    #allocation9 [shape = 'u8[512]{0}', space=vmem, size = 0x400, scoped, tag = 'input window, operand 4, single buffered']
    #allocation10 [shape = 'u8[1024]{0}', space=vmem, size = 0x400, scoped, tag = 'output window, operand 0, single buffered']
    %10 = vsyncpa [#allocation4], 0
    %11 = vsyncpa [#allocation7], 0
    %12 = vsyncpa [#allocation5], 0
    loop: start=0, step=1, limit=6
    $region2: #{img_encoder_forward.1} parent=1 // loop_pre_header
      _
    $region3: #{img_encoder_forward.1} parent=1 // loop_header
      %s14 = sphi 0, %s18
      %p15 = scmp.ge.s32.totalorder %s14, 6
      %s24 = sphi 0, %s26
      %s27 = sphi 0, %s24
      %s28 = sphi 0, %s27
      %s44 = sphi 0, %s28
      %s48 = sphi 0, %s48
      %s50 = sphi 0, %s48
      %s51 = sphi 0, %s50
      %s65 = sphi 0, %s51
      %s69 = sphi 0, %s69
      %s71 = sphi 0, %s69
      %s72 = sphi 0, %s71
      %s86 = sphi 0, %s72
      %s92 = sphi 0, %s94
      %s95 = sphi 0, %s92
      %s96 = sphi 0, %s95
      %s112 = sphi 0, %s96
      %s116 = sphi 0, %s116
      %s118 = sphi 0, %s116
      %s119 = sphi 0, %s118
      %s133 = sphi 0, %s119
      %s137 = sphi 0, %s137
      %s139 = sphi 0, %s137
      %s140 = sphi 0, %s139
      %s154 = sphi 0, %s140
    $region4: #{img_encoder_forward.1} parent=1 // loop_header_branch
      %17 = sbr.rel (%p15) target = $region8
    $region5: #{img_encoder_forward.1} parent=1 // loop_body
      %s19 = ssub.s32 %s14, 1
      %s20 = ssub.s32 %s14, 2
      %s21 = sadd.s32 %s14, 1
      %s22 = ssub.s32 %s14, %s21
      %p23 = scmp.eq.s32.totalorder %s22, 0
      %s25 = sadd.s32 %s24, 1
      %s26 = scalar_select %p23, %s24, %s25
      %p29 = pneg %p23
      %p30 = scmp.eq.s32.totalorder %s14, 3
      %p31 = por %p29, %p30
      %p32 = scmp.ne.s32.totalorder %s24, %s27
      %p33 = scmp.eq.s32.totalorder %s14, 0
      %p34 = por %p32, %p33
      %p35 = scmp.ne.s32.totalorder %s24, %s27
      %p36 = scmp.eq.s32.totalorder %s19, 3
      %p37 = por %p35, %p36
      %p38 = scmp.ne.s32.totalorder %s27, %s28
      %p39 = scmp.eq.s32.totalorder %s19, 0
      %p40 = por %p38, %p39
      %p41 = scmp.ne.s32.totalorder %s27, %s28
      %p42 = scmp.eq.s32.totalorder %s20, 3
      %p43 = por %p41, %p42
      %p45 = scmp.ne.s32.totalorder %s28, %s44
      %p46 = scmp.eq.s32.totalorder %s20, 0
      %p47 = por %p45, %p46
      %s49 = sadd.s32 %s48, 1
      %p52 = scmp.eq.s32.totalorder %s14, 3
      %p53 = scmp.ne.s32.totalorder %s48, %s50
      %p54 = scmp.eq.s32.totalorder %s14, 0
      %p55 = por %p53, %p54
      %p56 = scmp.ne.s32.totalorder %s48, %s50
      %p57 = scmp.eq.s32.totalorder %s19, 3
      %p58 = por %p56, %p57
      %p59 = scmp.ne.s32.totalorder %s50, %s51
      %p60 = scmp.eq.s32.totalorder %s19, 0
      %p61 = por %p59, %p60
      %p62 = scmp.ne.s32.totalorder %s50, %s51
      %p63 = scmp.eq.s32.totalorder %s20, 3
      %p64 = por %p62, %p63
      %p66 = scmp.ne.s32.totalorder %s51, %s65
      %p67 = scmp.eq.s32.totalorder %s20, 0
      %p68 = por %p66, %p67
      %s70 = sadd.s32 %s69, 1
      %p73 = scmp.eq.s32.totalorder %s14, 3
      %p74 = scmp.ne.s32.totalorder %s69, %s71
      %p75 = scmp.eq.s32.totalorder %s14, 0
      %p76 = por %p74, %p75
      %p77 = scmp.ne.s32.totalorder %s69, %s71
      %p78 = scmp.eq.s32.totalorder %s19, 3
      %p79 = por %p77, %p78
      %p80 = scmp.ne.s32.totalorder %s71, %s72
      %p81 = scmp.eq.s32.totalorder %s19, 0
      %p82 = por %p80, %p81
      %p83 = scmp.ne.s32.totalorder %s71, %s72
      %p84 = scmp.eq.s32.totalorder %s20, 3
      %p85 = por %p83, %p84
      %p87 = scmp.ne.s32.totalorder %s72, %s86
      %p88 = scmp.eq.s32.totalorder %s20, 0
      %p89 = por %p87, %p88
      %s90 = ssub.s32 %s14, %s21
      %p91 = scmp.eq.s32.totalorder %s90, 0
      %s93 = sadd.s32 %s92, 1
      %s94 = scalar_select %p91, %s92, %s93
      %p97 = pneg %p91
      %p98 = scmp.eq.s32.totalorder %s14, 3
      %p99 = por %p97, %p98
      %p100 = scmp.ne.s32.totalorder %s92, %s95
      %p101 = scmp.eq.s32.totalorder %s14, 0
      %p102 = por %p100, %p101
      %p103 = scmp.ne.s32.totalorder %s92, %s95
      %p104 = scmp.eq.s32.totalorder %s19, 3
      %p105 = por %p103, %p104
      %p106 = scmp.ne.s32.totalorder %s95, %s96
      %p107 = scmp.eq.s32.totalorder %s19, 0
      %p108 = por %p106, %p107
      %p109 = scmp.ne.s32.totalorder %s95, %s96
      %p110 = scmp.eq.s32.totalorder %s20, 3
      %p111 = por %p109, %p110
      %p113 = scmp.ne.s32.totalorder %s96, %s112
      %p114 = scmp.eq.s32.totalorder %s20, 0
      %p115 = por %p113, %p114
      %s117 = sadd.s32 %s116, 1
      %p120 = scmp.eq.s32.totalorder %s14, 3
      %p121 = scmp.ne.s32.totalorder %s116, %s118
      %p122 = scmp.eq.s32.totalorder %s14, 0
      %p123 = por %p121, %p122
      %p124 = scmp.ne.s32.totalorder %s116, %s118
      %p125 = scmp.eq.s32.totalorder %s19, 3
      %p126 = por %p124, %p125
      %p127 = scmp.ne.s32.totalorder %s118, %s119
      %p128 = scmp.eq.s32.totalorder %s19, 0
      %p129 = por %p127, %p128
      %p130 = scmp.ne.s32.totalorder %s118, %s119
      %p131 = scmp.eq.s32.totalorder %s20, 3
      %p132 = por %p130, %p131
      %p134 = scmp.ne.s32.totalorder %s119, %s133
      %p135 = scmp.eq.s32.totalorder %s20, 0
      %p136 = por %p134, %p135
      %s138 = sadd.s32 %s137, 1
      %p141 = scmp.eq.s32.totalorder %s14, 3
      %p142 = scmp.ne.s32.totalorder %s137, %s139
      %p143 = scmp.eq.s32.totalorder %s14, 0
      %p144 = por %p142, %p143
      %p145 = scmp.ne.s32.totalorder %s137, %s139
      %p146 = scmp.eq.s32.totalorder %s19, 3
      %p147 = por %p145, %p146
      %p148 = scmp.ne.s32.totalorder %s139, %s140
      %p149 = scmp.eq.s32.totalorder %s19, 0
      %p150 = por %p148, %p149
      %p151 = scmp.ne.s32.totalorder %s139, %s140
      %p152 = scmp.eq.s32.totalorder %s20, 3
      %p153 = por %p151, %p152
      %p155 = scmp.ne.s32.totalorder %s140, %s154
      %p156 = scmp.eq.s32.totalorder %s20, 0
      %p157 = por %p155, %p156
      %p158 = scmp.le.s32.totalorder 1, %s14
      %p159 = scmp.lt.s32.totalorder %s14, 5
      %p160 = pnand %p158, %p159
      %p161 = pneg %p160
      // Predicated region
      $region9: #{img_encoder_forward.1} parent=5 // pred_check
        _
      $region10: #{img_encoder_forward.1} parent=5 // pred_check_branch
        %163 = sbr.rel (%p160) target = $region12
      $region11: #{img_encoder_forward.1} parent=5 // pred_region
        %s164 = ssub.s32 %s14, 1
        // Predicated region
        $region13: #{img_encoder_forward.1} parent=11 // pred_check
          %p165 = pneg %p61
        $region14: #{img_encoder_forward.1} parent=11 // pred_check_branch
          %167 = sbr.rel (%p165) target = $region16
        $region15: #{img_encoder_forward.1} parent=11 // pred_region
          %s169 = ssub.s32 1024, 1024
          %170 = vsyncadd [#allocation4], %s169
          %s171 = sshll.u32 [#allocation3], 4
          %s172 = int_to_ptr.vmem [resolvable:$true] %s171
          %177 = dma.hbm_to_vmem [thread:$0]  %s1, 1024, %s172, [#allocation4], 64, 64, 4
        $region16: #{img_encoder_forward.1} parent=11 // pred_fallthru
          _
        // Predicated region
        $region17: #{img_encoder_forward.1} parent=11 // pred_check
          %p178 = pneg %p82
        $region18: #{img_encoder_forward.1} parent=11 // pred_check_branch
          %180 = sbr.rel (%p178) target = $region20
        $region19: #{img_encoder_forward.1} parent=11 // pred_region
          %s182 = ssub.s32 16, 16
          %183 = vsyncadd [#allocation7], %s182
          %s185 = sshll.u32 [#allocation6], 4
          %s186 = int_to_ptr.vmem [resolvable:$true] %s185
          %188 = dma.hbm_to_vmem [thread:$0]  %s2, 16, %s186, [#allocation7]
        $region20: #{img_encoder_forward.1} parent=11 // pred_fallthru
          _
        // Predicated region
        $region21: #{img_encoder_forward.1} parent=11 // pred_check
          %p189 = pneg %p129
        $region22: #{img_encoder_forward.1} parent=11 // pred_check_branch
          %191 = sbr.rel (%p189) target = $region24
        $region23: #{img_encoder_forward.1} parent=11 // pred_region
          %s193 = ssub.s32 16, 16
          %194 = vsyncadd [#allocation7], %s193
          %s196 = sshll.u32 [#allocation9], 4
          %s197 = int_to_ptr.vmem [resolvable:$true] %s196
          %199 = dma.hbm_to_vmem [thread:$0]  %s4, 16, %s197, [#allocation7]
        $region24: #{img_encoder_forward.1} parent=11 // pred_fallthru
          _
      $region12: #{img_encoder_forward.1} parent=5 // pred_fallthru
        _
      %p200 = scmp.lt.s32.totalorder %s14, 4
      // Predicated region
      $region25: #{img_encoder_forward.1} parent=5 // pred_check
        %p201 = pneg %p200
      $region26: #{img_encoder_forward.1} parent=5 // pred_check_branch
        %203 = sbr.rel (%p201) target = $region28
      $region27: #{img_encoder_forward.1} parent=5 // pred_region
        // Predicated region
        $region29: #{img_encoder_forward.1} parent=27 // pred_check
          %p204 = pneg %p34
        $region30: #{img_encoder_forward.1} parent=27 // pred_check_branch
          %206 = sbr.rel (%p204) target = $region32
        $region31: #{img_encoder_forward.1} parent=27 // pred_region
          %s207 = smul.u32 4, %s14
          %p208 = scmp.lt.s32.totalorder %s207, 15
          %s209 = scalar_select %p208, %s207, 15
          %s210 = smul.addr %s209, 4
          %s211 = scalar_lea.vmem %s0, %s210
          %s212 = smul.u32 4, %s14
        $region32: #{img_encoder_forward.1} parent=27 // pred_fallthru
          _
        // Predicated region
        $region33: #{img_encoder_forward.1} parent=27 // pred_check
          %p213 = pneg %p102
        $region34: #{img_encoder_forward.1} parent=27 // pred_check_branch
          %215 = sbr.rel (%p213) target = $region36
        $region35: #{img_encoder_forward.1} parent=27 // pred_region
          %s216 = sand.u32 %s14, 1
          %s217 = scalar_lea.sflag [#allocation4], %s216
          %s218 = sand.u32 %s92, 1
          %s219 = smul.addr %s218, 1024
          %s220 = scalar_lea.vmem [#allocation8], %s219
          %s221 = smul.u32 16, %s14
          %s223 = ssub.s32 16384, 16384
          %224 = vsyncadd %s217, %s223
          %s225 = smul.addr %s221, 16
          %s226 = smul.addr %s225, 64
          %s227 = scalar_lea.hbm %s3, %s226
          %s228 = sshll.u32 %s220, 4
          %s229 = int_to_ptr.vmem [resolvable:$true] %s228
          %234 = dma.hbm_to_vmem [thread:$0]  %s227, 16384, %s229, %s217, 64, 64, 4
        $region36: #{img_encoder_forward.1} parent=27 // pred_fallthru
          _
      $region28: #{img_encoder_forward.1} parent=5 // pred_fallthru
        _
      %p235 = scmp.le.s32.totalorder 1, %s14
      %p236 = scmp.lt.s32.totalorder %s14, 5
      %p237 = pnand %p235, %p236
      %p238 = pneg %p237
      // Predicated region
      $region37: #{img_encoder_forward.1} parent=5 // pred_check
        _
      $region38: #{img_encoder_forward.1} parent=5 // pred_check_branch
        %240 = sbr.rel (%p237) target = $region40
      $region39: #{img_encoder_forward.1} parent=5 // pred_region
        %s241 = ssub.s32 %s14, 1
        // Predicated region
        $region41: #{img_encoder_forward.1} parent=39 // pred_check
          %p242 = pneg %p61
        $region42: #{img_encoder_forward.1} parent=39 // pred_check_branch
          %244 = sbr.rel (%p242) target = $region44
        $region43: #{img_encoder_forward.1} parent=39 // pred_region
          %245 = dma.done [#allocation4], 1024
        $region44: #{img_encoder_forward.1} parent=39 // pred_fallthru
          _
        // Predicated region
        $region45: #{img_encoder_forward.1} parent=39 // pred_check
          %p246 = pneg %p82
        $region46: #{img_encoder_forward.1} parent=39 // pred_check_branch
          %248 = sbr.rel (%p246) target = $region48
        $region47: #{img_encoder_forward.1} parent=39 // pred_region
          %249 = dma.done [#allocation7], 16
        $region48: #{img_encoder_forward.1} parent=39 // pred_fallthru
          _
        %s250 = sand.u32 %s19, 1
        %s251 = scalar_lea.sflag [#allocation4], %s250
        %s252 = sand.u32 %s95, 1
        %s253 = smul.addr %s252, 1024
        %s254 = scalar_lea.vmem [#allocation8], %s253
        // Predicated region
        $region49: #{img_encoder_forward.1} parent=39 // pred_check
          %p255 = pneg %p108
        $region50: #{img_encoder_forward.1} parent=39 // pred_check_branch
          %257 = sbr.rel (%p255) target = $region52
        $region51: #{img_encoder_forward.1} parent=39 // pred_region
          %258 = dma.done %s251, 16384
        $region52: #{img_encoder_forward.1} parent=39 // pred_fallthru
          _
        // Predicated region
        $region53: #{img_encoder_forward.1} parent=39 // pred_check
          %p259 = pneg %p129
        $region54: #{img_encoder_forward.1} parent=39 // pred_check_branch
          %261 = sbr.rel (%p259) target = $region56
        $region55: #{img_encoder_forward.1} parent=39 // pred_region
          %262 = dma.done [#allocation7], 16
        $region56: #{img_encoder_forward.1} parent=39 // pred_fallthru
          _
        %s263 = smul.u32 4, %s19
        %p264 = scmp.lt.s32.totalorder %s263, 15
        %s265 = scalar_select %p264, %s263, 15
        %s266 = smul.addr %s265, 4
        %s267 = scalar_lea.vmem %s0, %s266
        %p268 = pneg %p40
        %p269 = pneg %p37
        %p270 = pneg %p61
        %p271 = pneg %p58
        %p272 = pneg %p82
        %p273 = pneg %p79
        %s274 = sand.u32 %s19, 1
        %s275 = scalar_lea.sflag [#allocation4], %s274
        %s276 = sand.u32 %s95, 1
        %s277 = smul.addr %s276, 1024
        %s278 = scalar_lea.vmem [#allocation8], %s277
        %p279 = pneg %p108
        %p280 = pneg %p105
        %p281 = pneg %p129
        %p282 = pneg %p126
        %p283 = pneg %p150
        %p284 = pneg %p147
        %s285 = smul.u32 4, %s19
        %p286 = scmp.lt.s32.totalorder %s285, 15
        %s287 = scalar_select %p286, %s285, 15
        %s288 = smul.addr %s287, 4
        %s289 = scalar_lea.vmem %s0, %s288
        %s290 = smul.u32 4, %s19
        %s291 = smul.u32 16, %s19
        %p293 = scmp.eq.s32.totalorder %s19, 0
        // Predicated region
        $region57: #{img_encoder_forward.1} parent=39 // pred_check
          %p294 = pneg %p293
        $region58: #{img_encoder_forward.1} parent=39 // pred_check_branch
          %296 = sbr.rel (%p294) target = $region60
        $region59: #{img_encoder_forward.1} parent=39 // pred_region
          %297 = vst [vmem:[#allocation2] sm:$0x3] 0.0
        $region60: #{img_encoder_forward.1} parent=39 // pred_fallthru
          _
        %v298 = vld [vmem:[%s289] sm:$0xf]
        %v299 = vld [vmem:[%s289 + $0x4] sm:$0xf]
        %v300 = vld [vmem:[%s289 + $0x8] sm:$0xf]
        %v301 = vld [vmem:[%s289 + $0xc] sm:$0xf]
        %v302 = vld [vmem:[#allocation3] sm:$0xf]
        %v303 = vld [vmem:[#allocation3 + $0x4] sm:$0xf]
        %v304 = vld [vmem:[#allocation3 + $0x8] sm:$0xf]
        %v305 = vld [vmem:[#allocation3 + $0xc] sm:$0xf]
        %v306 = vld [vmem:[#allocation3 + $0x10] sm:$0xf]
        %v307 = vld [vmem:[#allocation3 + $0x14] sm:$0xf]
        %v308 = vld [vmem:[#allocation3 + $0x18] sm:$0xf]
        %v309 = vld [vmem:[#allocation3 + $0x1c] sm:$0xf]
        %v310 = vld [vmem:[#allocation3 + $0x20] sm:$0xf]
        %v311 = vld [vmem:[#allocation3 + $0x24] sm:$0xf]
        %v312 = vld [vmem:[#allocation3 + $0x28] sm:$0xf]
        %v313 = vld [vmem:[#allocation3 + $0x2c] sm:$0xf]
        %v314 = vld [vmem:[#allocation3 + $0x30] sm:$0xf]
        %v315 = vld [vmem:[#allocation3 + $0x34] sm:$0xf]
        %v316 = vld [vmem:[#allocation3 + $0x38] sm:$0xf]
        %v317 = vld [vmem:[#allocation3 + $0x3c] sm:$0xf]
        %v318 = vld [vmem:[#allocation6] sm:$0x1]
        %v320 = vlaneseq
        %v321 = vshrl.u32 %v320, 7
        %v322 = vsub.s32 0, %v321
        %v323 = vrot.slane %v318, %v322
        %v329 = vunpack.c.l.b16 %v298
        %v330 = vunpack.c.l.b16 %v299
        %v331 = vunpack.c.l.b16 %v300
        %v332 = vunpack.c.l.b16 %v301
        %v333 = vpack.c.b16 %v330, %v329
        %v334 = vpack.c.b16 %v332, %v331
        %v353 = vunpack.c.l.b16 %v302
        %v354 = vunpack.c.l.b16 %v303
        %v355 = vunpack.c.l.b16 %v304
        %v356 = vunpack.c.l.b16 %v305
        %v357 = vunpack.c.l.b16 %v306
        %v358 = vunpack.c.l.b16 %v307
        %v359 = vunpack.c.l.b16 %v308
        %v360 = vunpack.c.l.b16 %v309
        %v361 = vunpack.c.l.b16 %v310
        %v362 = vunpack.c.l.b16 %v311
        %v363 = vunpack.c.l.b16 %v312
        %v364 = vunpack.c.l.b16 %v313
        %v365 = vunpack.c.l.b16 %v314
        %v366 = vunpack.c.l.b16 %v315
        %v367 = vunpack.c.l.b16 %v316
        %v368 = vunpack.c.l.b16 %v317
        %v369 = vpack.c.b16 %v354, %v353
        %v370 = vpack.c.b16 %v356, %v355
        %v371 = vpack.c.b16 %v358, %v357
        %v372 = vpack.c.b16 %v360, %v359
        %v373 = vpack.c.b16 %v362, %v361
        %v374 = vpack.c.b16 %v364, %v363
        %v375 = vpack.c.b16 %v366, %v365
        %v376 = vpack.c.b16 %v368, %v367
        %385 = vmatprep.subr.bf16.mxu0 0
        %386 = vmatpush1.bf16.msra.mxu0 %v369
        %387 = vmatprep.subr.bf16.mxu0 0
        %388 = vmatpush1.bf16.msra.mxu0 %v370
        %389 = vmatprep.subr.bf16.mxu0 0
        %390 = vmatpush1.bf16.msra.mxu0 %v371
        %391 = vmatprep.subr.bf16.mxu0 0
        %392 = vmatpush1.bf16.msra.mxu0 %v372
        %393 = vmatprep.subr.bf16.mxu0 0
        %394 = vmatpush1.bf16.msra.mxu0 %v373
        %395 = vmatprep.subr.bf16.mxu0 0
        %396 = vmatpush1.bf16.msra.mxu0 %v374
        %397 = vmatprep.subr.bf16.mxu0 0
        %398 = vmatpush1.bf16.msra.mxu0 %v375
        %399 = vmatprep.subr.bf16.mxu0 0
        %400 = vmatpush1.bf16.msra.mxu0 %v376
        %401 = vmatprep.subr.bf16.mxu0 0
        %402 = vmatpush1.bf16.msra.mxu0 0
        %403 = vmatprep.subr.bf16.mxu0 0
        %404 = vmatpush1.bf16.msra.mxu0 0
        %405 = vmatprep.subr.bf16.mxu0 0
        %406 = vmatpush1.bf16.msra.mxu0 0
        %407 = vmatprep.subr.bf16.mxu0 0
        %408 = vmatpush1.bf16.msra.mxu0 0
        %409 = vmatprep.subr.bf16.mxu0 0
        %410 = vmatpush1.bf16.msra.mxu0 0
        %411 = vmatprep.subr.bf16.mxu0 0
        %412 = vmatpush1.bf16.msra.mxu0 0
        %413 = vmatprep.subr.bf16.mxu0 0
        %414 = vmatpush1.bf16.msra.mxu0 0
        %415 = vmatprep.subr.bf16.mxu0 0
        %416 = vmatpush1.bf16.msra.mxu0 0
        %417 = vmatprep.mubr.bf16.mxu0 0
        %418 = vmatmul.mubr.bf16.gmra.mrb[0].mxu0 %v333
        %v419 = vpop.f32.mrb[0].mxu0
        %v420 = vadd.f32 %v323, %v419
        %v421 = vpop.f32.mrb[0].mxu0
        %v422 = vpop.f32.mrb[0].mxu0
        %v423 = vadd.f32 %v323, %v422
        %v424 = vpop.f32.mrb[0].mxu0
        %425 = vmatprep.mubr.bf16.mxu0 0
        %426 = vmatmul.mubr.bf16.gmra.mrb[0].mxu0 %v334
        %v427 = vpop.f32.mrb[0].mxu0
        %v428 = vadd.f32 %v323, %v427
        %v429 = vpop.f32.mrb[0].mxu0
        %v430 = vpop.f32.mrb[0].mxu0
        %v431 = vadd.f32 %v323, %v430
        %v432 = vpop.f32.mrb[0].mxu0
        %433 = vdwg.mxu0
        %v434 = vmax.f32 %v420, 0.0
        %v435 = vmax.f32 %v423, 0.0
        %v436 = vmax.f32 %v428, 0.0
        %v437 = vmax.f32 %v431, 0.0
        %v438 = vpack.c.bf16 %v434, %v434
        %v439 = vld [vmem:[%s254] sm:$0xf]
        %v440 = vld [vmem:[%s254 + $0x4] sm:$0xf]
        %v441 = vld [vmem:[%s254 + $0x8] sm:$0xf]
        %v442 = vld [vmem:[%s254 + $0xc] sm:$0xf]
        %v443 = vld [vmem:[%s254 + $0x10] sm:$0xf]
        %v444 = vld [vmem:[%s254 + $0x14] sm:$0xf]
        %v445 = vld [vmem:[%s254 + $0x18] sm:$0xf]
        %v446 = vld [vmem:[%s254 + $0x1c] sm:$0xf]
        %v447 = vld [vmem:[%s254 + $0x20] sm:$0xf]
        %v448 = vld [vmem:[%s254 + $0x24] sm:$0xf]
        %v449 = vld [vmem:[%s254 + $0x28] sm:$0xf]
        %v450 = vld [vmem:[%s254 + $0x2c] sm:$0xf]
        %v451 = vld [vmem:[%s254 + $0x30] sm:$0xf]
        %v452 = vld [vmem:[%s254 + $0x34] sm:$0xf]
        %v453 = vld [vmem:[%s254 + $0x38] sm:$0xf]
        %v454 = vld [vmem:[%s254 + $0x3c] sm:$0xf]
        %s455 = scalar_lea.vmem %s254, 64 [#allocation8]
        %v456 = vld [vmem:[%s455] sm:$0xf]
        %v457 = vld [vmem:[%s455 + $0x4] sm:$0xf]
        %v458 = vld [vmem:[%s455 + $0x8] sm:$0xf]
        %v459 = vld [vmem:[%s455 + $0xc] sm:$0xf]
        %v460 = vld [vmem:[%s455 + $0x10] sm:$0xf]
        %v461 = vld [vmem:[%s455 + $0x14] sm:$0xf]
        %v462 = vld [vmem:[%s455 + $0x18] sm:$0xf]
        %v463 = vld [vmem:[%s455 + $0x1c] sm:$0xf]
        %v464 = vld [vmem:[%s455 + $0x20] sm:$0xf]
        %v465 = vld [vmem:[%s455 + $0x24] sm:$0xf]
        %v466 = vld [vmem:[%s455 + $0x28] sm:$0xf]
        %v467 = vld [vmem:[%s455 + $0x2c] sm:$0xf]
        %v468 = vld [vmem:[%s455 + $0x30] sm:$0xf]
        %v469 = vld [vmem:[%s455 + $0x34] sm:$0xf]
        %v470 = vld [vmem:[%s455 + $0x38] sm:$0xf]
        %v471 = vld [vmem:[%s455 + $0x3c] sm:$0xf]
        %v473 = vrot.slane %v438, 1
        %v491 = vunpack.c.l.b16 %v456
        %v492 = vunpack.c.l.b16 %v457
        %v493 = vunpack.c.l.b16 %v458
        %v494 = vunpack.c.l.b16 %v459
        %v495 = vunpack.c.l.b16 %v460
        %v496 = vunpack.c.l.b16 %v461
        %v497 = vunpack.c.l.b16 %v462
        %v498 = vunpack.c.l.b16 %v463
        %v499 = vunpack.c.l.b16 %v464
        %v500 = vunpack.c.l.b16 %v465
        %v501 = vunpack.c.l.b16 %v466
        %v502 = vunpack.c.l.b16 %v467
        %v503 = vunpack.c.l.b16 %v468
        %v504 = vunpack.c.l.b16 %v469
        %v505 = vunpack.c.l.b16 %v470
        %v506 = vunpack.c.l.b16 %v471
        %v507 = vpack.c.b16 %v492, %v491
        %v508 = vpack.c.b16 %v494, %v493
        %v509 = vpack.c.b16 %v496, %v495
        %v510 = vpack.c.b16 %v498, %v497
        %v511 = vpack.c.b16 %v500, %v499
        %v512 = vpack.c.b16 %v502, %v501
        %v513 = vpack.c.b16 %v504, %v503
        %v514 = vpack.c.b16 %v506, %v505
        %523 = vmatprep.subr.bf16.mxu0 0
        %524 = vmatpush1.bf16.msra.mxu0 %v507
        %525 = vmatprep.subr.bf16.mxu0 0
        %526 = vmatpush1.bf16.msra.mxu0 %v508
        %527 = vmatprep.subr.bf16.mxu0 0
        %528 = vmatpush1.bf16.msra.mxu0 %v509
        %529 = vmatprep.subr.bf16.mxu0 0
        %530 = vmatpush1.bf16.msra.mxu0 %v510
        %531 = vmatprep.subr.bf16.mxu0 0
        %532 = vmatpush1.bf16.msra.mxu0 %v511
        %533 = vmatprep.subr.bf16.mxu0 0
        %534 = vmatpush1.bf16.msra.mxu0 %v512
        %535 = vmatprep.subr.bf16.mxu0 0
        %536 = vmatpush1.bf16.msra.mxu0 %v513
        %537 = vmatprep.subr.bf16.mxu0 0
        %538 = vmatpush1.bf16.msra.mxu0 %v514
        %539 = vmatprep.subr.bf16.mxu0 0
        %540 = vmatpush1.bf16.msra.mxu0 0
        %541 = vmatprep.subr.bf16.mxu0 0
        %542 = vmatpush1.bf16.msra.mxu0 0
        %543 = vmatprep.subr.bf16.mxu0 0
        %544 = vmatpush1.bf16.msra.mxu0 0
        %545 = vmatprep.subr.bf16.mxu0 0
        %546 = vmatpush1.bf16.msra.mxu0 0
        %547 = vmatprep.subr.bf16.mxu0 0
        %548 = vmatpush1.bf16.msra.mxu0 0
        %549 = vmatprep.subr.bf16.mxu0 0
        %550 = vmatpush1.bf16.msra.mxu0 0
        %551 = vmatprep.subr.bf16.mxu0 0
        %552 = vmatpush1.bf16.msra.mxu0 0
        %553 = vmatprep.subr.bf16.mxu0 0
        %554 = vmatpush1.bf16.msra.mxu0 0
        %555 = vmatprep.mubr.bf16.mxu0 0
        %556 = vmatmul.mubr.bf16.gmra.mrb[0].mxu0 %v473
        %v557 = vpop.f32.mrb[0].mxu0
        %v558 = vadd.f32 0.0, %v557
        %v559 = vpop.f32.mrb[0].mxu0
        %v560 = vpop.f32.mrb[0].mxu0
        %v561 = vpop.f32.mrb[0].mxu0
        %562 = vdwg.mxu0
        %v579 = vunpack.c.l.b16 %v439
        %v580 = vunpack.c.l.b16 %v440
        %v581 = vunpack.c.l.b16 %v441
        %v582 = vunpack.c.l.b16 %v442
        %v583 = vunpack.c.l.b16 %v443
        %v584 = vunpack.c.l.b16 %v444
        %v585 = vunpack.c.l.b16 %v445
        %v586 = vunpack.c.l.b16 %v446
        %v587 = vunpack.c.l.b16 %v447
        %v588 = vunpack.c.l.b16 %v448
        %v589 = vunpack.c.l.b16 %v449
        %v590 = vunpack.c.l.b16 %v450
        %v591 = vunpack.c.l.b16 %v451
        %v592 = vunpack.c.l.b16 %v452
        %v593 = vunpack.c.l.b16 %v453
        %v594 = vunpack.c.l.b16 %v454
        %v595 = vpack.c.b16 %v580, %v579
        %v596 = vpack.c.b16 %v582, %v581
        %v597 = vpack.c.b16 %v584, %v583
        %v598 = vpack.c.b16 %v586, %v585
        %v599 = vpack.c.b16 %v588, %v587
        %v600 = vpack.c.b16 %v590, %v589
        %v601 = vpack.c.b16 %v592, %v591
        %v602 = vpack.c.b16 %v594, %v593
        %611 = vmatprep.subr.bf16.mxu0 0
        %612 = vmatpush1.bf16.msra.mxu0 %v595
        %613 = vmatprep.subr.bf16.mxu0 0
        %614 = vmatpush1.bf16.msra.mxu0 %v596
        %615 = vmatprep.subr.bf16.mxu0 0
        %616 = vmatpush1.bf16.msra.mxu0 %v597
        %617 = vmatprep.subr.bf16.mxu0 0
        %618 = vmatpush1.bf16.msra.mxu0 %v598
        %619 = vmatprep.subr.bf16.mxu0 0
        %620 = vmatpush1.bf16.msra.mxu0 %v599
        %621 = vmatprep.subr.bf16.mxu0 0
        %622 = vmatpush1.bf16.msra.mxu0 %v600
        %623 = vmatprep.subr.bf16.mxu0 0
        %624 = vmatpush1.bf16.msra.mxu0 %v601
        %625 = vmatprep.subr.bf16.mxu0 0
        %626 = vmatpush1.bf16.msra.mxu0 %v602
        %627 = vmatprep.subr.bf16.mxu0 0
        %628 = vmatpush1.bf16.msra.mxu0 0
        %629 = vmatprep.subr.bf16.mxu0 0
        %630 = vmatpush1.bf16.msra.mxu0 0
        %631 = vmatprep.subr.bf16.mxu0 0
        %632 = vmatpush1.bf16.msra.mxu0 0
        %633 = vmatprep.subr.bf16.mxu0 0
        %634 = vmatpush1.bf16.msra.mxu0 0
        %635 = vmatprep.subr.bf16.mxu0 0
        %636 = vmatpush1.bf16.msra.mxu0 0
        %637 = vmatprep.subr.bf16.mxu0 0
        %638 = vmatpush1.bf16.msra.mxu0 0
        %639 = vmatprep.subr.bf16.mxu0 0
        %640 = vmatpush1.bf16.msra.mxu0 0
        %641 = vmatprep.subr.bf16.mxu0 0
        %642 = vmatpush1.bf16.msra.mxu0 0
        %643 = vmatprep.mubr.bf16.mxu0 0
        %644 = vmatmul.mubr.bf16.gmra.mrb[0].mxu0 %v438
        %v645 = vpop.f32.mrb[0].mxu0
        %v646 = vadd.f32 %v558, %v645
        %v647 = vpop.f32.mrb[0].mxu0
        %v648 = vpop.f32.mrb[0].mxu0
        %v649 = vpop.f32.mrb[0].mxu0
        %650 = vdwg.mxu0
        %s651 = scalar_lea.vmem %s254, 128 [#allocation8]
        %v652 = vld [vmem:[%s651] sm:$0xf]
        %v653 = vld [vmem:[%s651 + $0x4] sm:$0xf]
        %v654 = vld [vmem:[%s651 + $0x8] sm:$0xf]
        %v655 = vld [vmem:[%s651 + $0xc] sm:$0xf]
        %v656 = vld [vmem:[%s651 + $0x10] sm:$0xf]
        %v657 = vld [vmem:[%s651 + $0x14] sm:$0xf]
        %v658 = vld [vmem:[%s651 + $0x18] sm:$0xf]
        %v659 = vld [vmem:[%s651 + $0x1c] sm:$0xf]
        %v660 = vld [vmem:[%s651 + $0x20] sm:$0xf]
        %v661 = vld [vmem:[%s651 + $0x24] sm:$0xf]
        %v662 = vld [vmem:[%s651 + $0x28] sm:$0xf]
        %v663 = vld [vmem:[%s651 + $0x2c] sm:$0xf]
        %v664 = vld [vmem:[%s651 + $0x30] sm:$0xf]
        %v665 = vld [vmem:[%s651 + $0x34] sm:$0xf]
        %v666 = vld [vmem:[%s651 + $0x38] sm:$0xf]
        %v667 = vld [vmem:[%s651 + $0x3c] sm:$0xf]
        %v668 = vrot.slane %v438, 2
        %v686 = vunpack.c.l.b16 %v652
        %v687 = vunpack.c.l.b16 %v653
        %v688 = vunpack.c.l.b16 %v654
        %v689 = vunpack.c.l.b16 %v655
        %v690 = vunpack.c.l.b16 %v656
        %v691 = vunpack.c.l.b16 %v657
        %v692 = vunpack.c.l.b16 %v658
        %v693 = vunpack.c.l.b16 %v659
        %v694 = vunpack.c.l.b16 %v660
        %v695 = vunpack.c.l.b16 %v661
        %v696 = vunpack.c.l.b16 %v662
        %v697 = vunpack.c.l.b16 %v663
        %v698 = vunpack.c.l.b16 %v664
        %v699 = vunpack.c.l.b16 %v665
        %v700 = vunpack.c.l.b16 %v666
        %v701 = vunpack.c.l.b16 %v667
        %v702 = vpack.c.b16 %v687, %v686
        %v703 = vpack.c.b16 %v689, %v688
        %v704 = vpack.c.b16 %v691, %v690
        %v705 = vpack.c.b16 %v693, %v692
        %v706 = vpack.c.b16 %v695, %v694
        %v707 = vpack.c.b16 %v697, %v696
        %v708 = vpack.c.b16 %v699, %v698
        %v709 = vpack.c.b16 %v701, %v700
        %718 = vmatprep.subr.bf16.mxu0 0
        %719 = vmatpush1.bf16.msra.mxu0 %v702
        %720 = vmatprep.subr.bf16.mxu0 0
        %721 = vmatpush1.bf16.msra.mxu0 %v703
        %722 = vmatprep.subr.bf16.mxu0 0
        %723 = vmatpush1.bf16.msra.mxu0 %v704
        %724 = vmatprep.subr.bf16.mxu0 0
        %725 = vmatpush1.bf16.msra.mxu0 %v705
        %726 = vmatprep.subr.bf16.mxu0 0
        %727 = vmatpush1.bf16.msra.mxu0 %v706
        %728 = vmatprep.subr.bf16.mxu0 0
        %729 = vmatpush1.bf16.msra.mxu0 %v707
        %730 = vmatprep.subr.bf16.mxu0 0
        %731 = vmatpush1.bf16.msra.mxu0 %v708
        %732 = vmatprep.subr.bf16.mxu0 0
        %733 = vmatpush1.bf16.msra.mxu0 %v709
        %734 = vmatprep.subr.bf16.mxu0 0
        %735 = vmatpush1.bf16.msra.mxu0 0
        %736 = vmatprep.subr.bf16.mxu0 0
        %737 = vmatpush1.bf16.msra.mxu0 0
        %738 = vmatprep.subr.bf16.mxu0 0
        %739 = vmatpush1.bf16.msra.mxu0 0
        %740 = vmatprep.subr.bf16.mxu0 0
        %741 = vmatpush1.bf16.msra.mxu0 0
        %742 = vmatprep.subr.bf16.mxu0 0
        %743 = vmatpush1.bf16.msra.mxu0 0
        %744 = vmatprep.subr.bf16.mxu0 0
        %745 = vmatpush1.bf16.msra.mxu0 0
        %746 = vmatprep.subr.bf16.mxu0 0
        %747 = vmatpush1.bf16.msra.mxu0 0
        %748 = vmatprep.subr.bf16.mxu0 0
        %749 = vmatpush1.bf16.msra.mxu0 0
        %750 = vmatprep.mubr.bf16.mxu0 0
        %751 = vmatmul.mubr.bf16.gmra.mrb[0].mxu0 %v668
        %v752 = vpop.f32.mrb[0].mxu0
        %v753 = vadd.f32 0.0, %v752
        %v754 = vpop.f32.mrb[0].mxu0
        %v755 = vpop.f32.mrb[0].mxu0
        %v756 = vpop.f32.mrb[0].mxu0
        %757 = vdwg.mxu0
        %v758 = vadd.f32 %v646, %v753
        %s759 = scalar_lea.vmem %s254, 192 [#allocation8]
        %v760 = vld [vmem:[%s759] sm:$0xf]
        %v761 = vld [vmem:[%s759 + $0x4] sm:$0xf]
        %v762 = vld [vmem:[%s759 + $0x8] sm:$0xf]
        %v763 = vld [vmem:[%s759 + $0xc] sm:$0xf]
        %v764 = vld [vmem:[%s759 + $0x10] sm:$0xf]
        %v765 = vld [vmem:[%s759 + $0x14] sm:$0xf]
        %v766 = vld [vmem:[%s759 + $0x18] sm:$0xf]
        %v767 = vld [vmem:[%s759 + $0x1c] sm:$0xf]
        %v768 = vld [vmem:[%s759 + $0x20] sm:$0xf]
        %v769 = vld [vmem:[%s759 + $0x24] sm:$0xf]
        %v770 = vld [vmem:[%s759 + $0x28] sm:$0xf]
        %v771 = vld [vmem:[%s759 + $0x2c] sm:$0xf]
        %v772 = vld [vmem:[%s759 + $0x30] sm:$0xf]
        %v773 = vld [vmem:[%s759 + $0x34] sm:$0xf]
        %v774 = vld [vmem:[%s759 + $0x38] sm:$0xf]
        %v775 = vld [vmem:[%s759 + $0x3c] sm:$0xf]
        %v776 = vrot.slane %v438, 3
        %v794 = vunpack.c.l.b16 %v760
        %v795 = vunpack.c.l.b16 %v761
        %v796 = vunpack.c.l.b16 %v762
        %v797 = vunpack.c.l.b16 %v763
        %v798 = vunpack.c.l.b16 %v764
        %v799 = vunpack.c.l.b16 %v765
        %v800 = vunpack.c.l.b16 %v766
        %v801 = vunpack.c.l.b16 %v767
        %v802 = vunpack.c.l.b16 %v768
        %v803 = vunpack.c.l.b16 %v769
        %v804 = vunpack.c.l.b16 %v770
        %v805 = vunpack.c.l.b16 %v771
        %v806 = vunpack.c.l.b16 %v772
        %v807 = vunpack.c.l.b16 %v773
        %v808 = vunpack.c.l.b16 %v774
        %v809 = vunpack.c.l.b16 %v775
        %v810 = vpack.c.b16 %v795, %v794
        %v811 = vpack.c.b16 %v797, %v796
        %v812 = vpack.c.b16 %v799, %v798
        %v813 = vpack.c.b16 %v801, %v800
        %v814 = vpack.c.b16 %v803, %v802
        %v815 = vpack.c.b16 %v805, %v804
        %v816 = vpack.c.b16 %v807, %v806
        %v817 = vpack.c.b16 %v809, %v808
        %826 = vmatprep.subr.bf16.mxu0 0
        %827 = vmatpush1.bf16.msra.mxu0 %v810
        %828 = vmatprep.subr.bf16.mxu0 0
        %829 = vmatpush1.bf16.msra.mxu0 %v811
        %830 = vmatprep.subr.bf16.mxu0 0
        %831 = vmatpush1.bf16.msra.mxu0 %v812
        %832 = vmatprep.subr.bf16.mxu0 0
        %833 = vmatpush1.bf16.msra.mxu0 %v813
        %834 = vmatprep.subr.bf16.mxu0 0
        %835 = vmatpush1.bf16.msra.mxu0 %v814
        %836 = vmatprep.subr.bf16.mxu0 0
        %837 = vmatpush1.bf16.msra.mxu0 %v815
        %838 = vmatprep.subr.bf16.mxu0 0
        %839 = vmatpush1.bf16.msra.mxu0 %v816
        %840 = vmatprep.subr.bf16.mxu0 0
        %841 = vmatpush1.bf16.msra.mxu0 %v817
        %842 = vmatprep.subr.bf16.mxu0 0
        %843 = vmatpush1.bf16.msra.mxu0 0
        %844 = vmatprep.subr.bf16.mxu0 0
        %845 = vmatpush1.bf16.msra.mxu0 0
        %846 = vmatprep.subr.bf16.mxu0 0
        %847 = vmatpush1.bf16.msra.mxu0 0
        %848 = vmatprep.subr.bf16.mxu0 0
        %849 = vmatpush1.bf16.msra.mxu0 0
        %850 = vmatprep.subr.bf16.mxu0 0
        %851 = vmatpush1.bf16.msra.mxu0 0
        %852 = vmatprep.subr.bf16.mxu0 0
        %853 = vmatpush1.bf16.msra.mxu0 0
        %854 = vmatprep.subr.bf16.mxu0 0
        %855 = vmatpush1.bf16.msra.mxu0 0
        %856 = vmatprep.subr.bf16.mxu0 0
        %857 = vmatpush1.bf16.msra.mxu0 0
        %858 = vmatprep.mubr.bf16.mxu0 0
        %859 = vmatmul.mubr.bf16.gmra.mrb[0].mxu0 %v776
        %v860 = vpop.f32.mrb[0].mxu0
        %v861 = vadd.f32 0.0, %v860
        %v862 = vpop.f32.mrb[0].mxu0
        %v863 = vpop.f32.mrb[0].mxu0
        %v864 = vpop.f32.mrb[0].mxu0
        %865 = vdwg.mxu0
        %v866 = vadd.f32 %v758, %v861
        %v867 = vpack.c.bf16 %v435, %v435
        %s868 = scalar_lea.vmem %s254, 256 [#allocation8]
        %v869 = vld [vmem:[%s868] sm:$0xf]
        %v870 = vld [vmem:[%s868 + $0x4] sm:$0xf]
        %v871 = vld [vmem:[%s868 + $0x8] sm:$0xf]
        %v872 = vld [vmem:[%s868 + $0xc] sm:$0xf]
        %v873 = vld [vmem:[%s868 + $0x10] sm:$0xf]
        %v874 = vld [vmem:[%s868 + $0x14] sm:$0xf]
        %v875 = vld [vmem:[%s868 + $0x18] sm:$0xf]
        %v876 = vld [vmem:[%s868 + $0x1c] sm:$0xf]
        %v877 = vld [vmem:[%s868 + $0x20] sm:$0xf]
        %v878 = vld [vmem:[%s868 + $0x24] sm:$0xf]
        %v879 = vld [vmem:[%s868 + $0x28] sm:$0xf]
        %v880 = vld [vmem:[%s868 + $0x2c] sm:$0xf]
        %v881 = vld [vmem:[%s868 + $0x30] sm:$0xf]
        %v882 = vld [vmem:[%s868 + $0x34] sm:$0xf]
        %v883 = vld [vmem:[%s868 + $0x38] sm:$0xf]
        %v884 = vld [vmem:[%s868 + $0x3c] sm:$0xf]
        %v901 = vunpack.c.l.b16 %v869
        %v902 = vunpack.c.l.b16 %v870
        %v903 = vunpack.c.l.b16 %v871
        %v904 = vunpack.c.l.b16 %v872
        %v905 = vunpack.c.l.b16 %v873
        %v906 = vunpack.c.l.b16 %v874
        %v907 = vunpack.c.l.b16 %v875
        %v908 = vunpack.c.l.b16 %v876
        %v909 = vunpack.c.l.b16 %v877
        %v910 = vunpack.c.l.b16 %v878
        %v911 = vunpack.c.l.b16 %v879
        %v912 = vunpack.c.l.b16 %v880
        %v913 = vunpack.c.l.b16 %v881
        %v914 = vunpack.c.l.b16 %v882
        %v915 = vunpack.c.l.b16 %v883
        %v916 = vunpack.c.l.b16 %v884
        %v917 = vpack.c.b16 %v902, %v901
        %v918 = vpack.c.b16 %v904, %v903
        %v919 = vpack.c.b16 %v906, %v905
        %v920 = vpack.c.b16 %v908, %v907
        %v921 = vpack.c.b16 %v910, %v909
        %v922 = vpack.c.b16 %v912, %v911
        %v923 = vpack.c.b16 %v914, %v913
        %v924 = vpack.c.b16 %v916, %v915
        %933 = vmatprep.subr.bf16.mxu0 0
        %934 = vmatpush1.bf16.msra.mxu0 %v917
        %935 = vmatprep.subr.bf16.mxu0 0
        %936 = vmatpush1.bf16.msra.mxu0 %v918
        %937 = vmatprep.subr.bf16.mxu0 0
        %938 = vmatpush1.bf16.msra.mxu0 %v919
        %939 = vmatprep.subr.bf16.mxu0 0
        %940 = vmatpush1.bf16.msra.mxu0 %v920
        %941 = vmatprep.subr.bf16.mxu0 0
        %942 = vmatpush1.bf16.msra.mxu0 %v921
        %943 = vmatprep.subr.bf16.mxu0 0
        %944 = vmatpush1.bf16.msra.mxu0 %v922
        %945 = vmatprep.subr.bf16.mxu0 0
        %946 = vmatpush1.bf16.msra.mxu0 %v923
        %947 = vmatprep.subr.bf16.mxu0 0
        %948 = vmatpush1.bf16.msra.mxu0 %v924
        %949 = vmatprep.subr.bf16.mxu0 0
        %950 = vmatpush1.bf16.msra.mxu0 0
        %951 = vmatprep.subr.bf16.mxu0 0
        %952 = vmatpush1.bf16.msra.mxu0 0
        %953 = vmatprep.subr.bf16.mxu0 0
        %954 = vmatpush1.bf16.msra.mxu0 0
        %955 = vmatprep.subr.bf16.mxu0 0
        %956 = vmatpush1.bf16.msra.mxu0 0
        %957 = vmatprep.subr.bf16.mxu0 0
        %958 = vmatpush1.bf16.msra.mxu0 0
        %959 = vmatprep.subr.bf16.mxu0 0
        %960 = vmatpush1.bf16.msra.mxu0 0
        %961 = vmatprep.subr.bf16.mxu0 0
        %962 = vmatpush1.bf16.msra.mxu0 0
        %963 = vmatprep.subr.bf16.mxu0 0
        %964 = vmatpush1.bf16.msra.mxu0 0
        %965 = vmatprep.mubr.bf16.mxu0 0
        %966 = vmatmul.mubr.bf16.gmra.mrb[0].mxu0 %v867
        %v967 = vpop.f32.mrb[0].mxu0
        %v968 = vadd.f32 0.0, %v967
        %v969 = vpop.f32.mrb[0].mxu0
        %v970 = vpop.f32.mrb[0].mxu0
        %v971 = vpop.f32.mrb[0].mxu0
        %972 = vdwg.mxu0
        %v973 = vadd.f32 %v866, %v968
        %s974 = scalar_lea.vmem %s254, 320 [#allocation8]
        %v975 = vld [vmem:[%s974] sm:$0xf]
        %v976 = vld [vmem:[%s974 + $0x4] sm:$0xf]
        %v977 = vld [vmem:[%s974 + $0x8] sm:$0xf]
        %v978 = vld [vmem:[%s974 + $0xc] sm:$0xf]
        %v979 = vld [vmem:[%s974 + $0x10] sm:$0xf]
        %v980 = vld [vmem:[%s974 + $0x14] sm:$0xf]
        %v981 = vld [vmem:[%s974 + $0x18] sm:$0xf]
        %v982 = vld [vmem:[%s974 + $0x1c] sm:$0xf]
        %v983 = vld [vmem:[%s974 + $0x20] sm:$0xf]
        %v984 = vld [vmem:[%s974 + $0x24] sm:$0xf]
        %v985 = vld [vmem:[%s974 + $0x28] sm:$0xf]
        %v986 = vld [vmem:[%s974 + $0x2c] sm:$0xf]
        %v987 = vld [vmem:[%s974 + $0x30] sm:$0xf]
        %v988 = vld [vmem:[%s974 + $0x34] sm:$0xf]
        %v989 = vld [vmem:[%s974 + $0x38] sm:$0xf]
        %v990 = vld [vmem:[%s974 + $0x3c] sm:$0xf]
        %v992 = vrot.slane %v867, 1
        %v1010 = vunpack.c.l.b16 %v975
        %v1011 = vunpack.c.l.b16 %v976
        %v1012 = vunpack.c.l.b16 %v977
        %v1013 = vunpack.c.l.b16 %v978
        %v1014 = vunpack.c.l.b16 %v979
        %v1015 = vunpack.c.l.b16 %v980
        %v1016 = vunpack.c.l.b16 %v981
        %v1017 = vunpack.c.l.b16 %v982
        %v1018 = vunpack.c.l.b16 %v983
        %v1019 = vunpack.c.l.b16 %v984
        %v1020 = vunpack.c.l.b16 %v985
        %v1021 = vunpack.c.l.b16 %v986
        %v1022 = vunpack.c.l.b16 %v987
        %v1023 = vunpack.c.l.b16 %v988
        %v1024 = vunpack.c.l.b16 %v989
        %v1025 = vunpack.c.l.b16 %v990
        %v1026 = vpack.c.b16 %v1011, %v1010
        %v1027 = vpack.c.b16 %v1013, %v1012
        %v1028 = vpack.c.b16 %v1015, %v1014
        %v1029 = vpack.c.b16 %v1017, %v1016
        %v1030 = vpack.c.b16 %v1019, %v1018
        %v1031 = vpack.c.b16 %v1021, %v1020
        %v1032 = vpack.c.b16 %v1023, %v1022
        %v1033 = vpack.c.b16 %v1025, %v1024
        %1042 = vmatprep.subr.bf16.mxu0 0
        %1043 = vmatpush1.bf16.msra.mxu0 %v1026
        %1044 = vmatprep.subr.bf16.mxu0 0
        %1045 = vmatpush1.bf16.msra.mxu0 %v1027
        %1046 = vmatprep.subr.bf16.mxu0 0
        %1047 = vmatpush1.bf16.msra.mxu0 %v1028
        %1048 = vmatprep.subr.bf16.mxu0 0
        %1049 = vmatpush1.bf16.msra.mxu0 %v1029
        %1050 = vmatprep.subr.bf16.mxu0 0
        %1051 = vmatpush1.bf16.msra.mxu0 %v1030
        %1052 = vmatprep.subr.bf16.mxu0 0
        %1053 = vmatpush1.bf16.msra.mxu0 %v1031
        %1054 = vmatprep.subr.bf16.mxu0 0
        %1055 = vmatpush1.bf16.msra.mxu0 %v1032
        %1056 = vmatprep.subr.bf16.mxu0 0
        %1057 = vmatpush1.bf16.msra.mxu0 %v1033
        %1058 = vmatprep.subr.bf16.mxu0 0
        %1059 = vmatpush1.bf16.msra.mxu0 0
        %1060 = vmatprep.subr.bf16.mxu0 0
        %1061 = vmatpush1.bf16.msra.mxu0 0
        %1062 = vmatprep.subr.bf16.mxu0 0
        %1063 = vmatpush1.bf16.msra.mxu0 0
        %1064 = vmatprep.subr.bf16.mxu0 0
        %1065 = vmatpush1.bf16.msra.mxu0 0
        %1066 = vmatprep.subr.bf16.mxu0 0
        %1067 = vmatpush1.bf16.msra.mxu0 0
        %1068 = vmatprep.subr.bf16.mxu0 0
        %1069 = vmatpush1.bf16.msra.mxu0 0
        %1070 = vmatprep.subr.bf16.mxu0 0
        %1071 = vmatpush1.bf16.msra.mxu0 0
        %1072 = vmatprep.subr.bf16.mxu0 0
        %1073 = vmatpush1.bf16.msra.mxu0 0
        %1074 = vmatprep.mubr.bf16.mxu0 0
        %1075 = vmatmul.mubr.bf16.gmra.mrb[0].mxu0 %v992
        %v1076 = vpop.f32.mrb[0].mxu0
        %v1077 = vadd.f32 0.0, %v1076
        %v1078 = vpop.f32.mrb[0].mxu0
        %v1079 = vpop.f32.mrb[0].mxu0
        %v1080 = vpop.f32.mrb[0].mxu0
        %1081 = vdwg.mxu0
        %v1082 = vadd.f32 %v973, %v1077
        %s1083 = scalar_lea.vmem %s254, 384 [#allocation8]
        %v1084 = vld [vmem:[%s1083] sm:$0xf]
        %v1085 = vld [vmem:[%s1083 + $0x4] sm:$0xf]
        %v1086 = vld [vmem:[%s1083 + $0x8] sm:$0xf]
        %v1087 = vld [vmem:[%s1083 + $0xc] sm:$0xf]
        %v1088 = vld [vmem:[%s1083 + $0x10] sm:$0xf]
        %v1089 = vld [vmem:[%s1083 + $0x14] sm:$0xf]
        %v1090 = vld [vmem:[%s1083 + $0x18] sm:$0xf]
        %v1091 = vld [vmem:[%s1083 + $0x1c] sm:$0xf]
        %v1092 = vld [vmem:[%s1083 + $0x20] sm:$0xf]
        %v1093 = vld [vmem:[%s1083 + $0x24] sm:$0xf]
        %v1094 = vld [vmem:[%s1083 + $0x28] sm:$0xf]
        %v1095 = vld [vmem:[%s1083 + $0x2c] sm:$0xf]
        %v1096 = vld [vmem:[%s1083 + $0x30] sm:$0xf]
        %v1097 = vld [vmem:[%s1083 + $0x34] sm:$0xf]
        %v1098 = vld [vmem:[%s1083 + $0x38] sm:$0xf]
        %v1099 = vld [vmem:[%s1083 + $0x3c] sm:$0xf]
        %v1100 = vrot.slane %v867, 2
        %v1118 = vunpack.c.l.b16 %v1084
        %v1119 = vunpack.c.l.b16 %v1085
        %v1120 = vunpack.c.l.b16 %v1086
        %v1121 = vunpack.c.l.b16 %v1087
        %v1122 = vunpack.c.l.b16 %v1088
        %v1123 = vunpack.c.l.b16 %v1089
        %v1124 = vunpack.c.l.b16 %v1090
        %v1125 = vunpack.c.l.b16 %v1091
        %v1126 = vunpack.c.l.b16 %v1092
        %v1127 = vunpack.c.l.b16 %v1093
        %v1128 = vunpack.c.l.b16 %v1094
        %v1129 = vunpack.c.l.b16 %v1095
        %v1130 = vunpack.c.l.b16 %v1096
        %v1131 = vunpack.c.l.b16 %v1097
        %v1132 = vunpack.c.l.b16 %v1098
        %v1133 = vunpack.c.l.b16 %v1099
        %v1134 = vpack.c.b16 %v1119, %v1118
        %v1135 = vpack.c.b16 %v1121, %v1120
        %v1136 = vpack.c.b16 %v1123, %v1122
        %v1137 = vpack.c.b16 %v1125, %v1124
        %v1138 = vpack.c.b16 %v1127, %v1126
        %v1139 = vpack.c.b16 %v1129, %v1128
        %v1140 = vpack.c.b16 %v1131, %v1130
        %v1141 = vpack.c.b16 %v1133, %v1132
        %1150 = vmatprep.subr.bf16.mxu0 0
        %1151 = vmatpush1.bf16.msra.mxu0 %v1134
        %1152 = vmatprep.subr.bf16.mxu0 0
        %1153 = vmatpush1.bf16.msra.mxu0 %v1135
        %1154 = vmatprep.subr.bf16.mxu0 0
        %1155 = vmatpush1.bf16.msra.mxu0 %v1136
        %1156 = vmatprep.subr.bf16.mxu0 0
        %1157 = vmatpush1.bf16.msra.mxu0 %v1137
        %1158 = vmatprep.subr.bf16.mxu0 0
        %1159 = vmatpush1.bf16.msra.mxu0 %v1138
        %1160 = vmatprep.subr.bf16.mxu0 0
        %1161 = vmatpush1.bf16.msra.mxu0 %v1139
        %1162 = vmatprep.subr.bf16.mxu0 0
        %1163 = vmatpush1.bf16.msra.mxu0 %v1140
        %1164 = vmatprep.subr.bf16.mxu0 0
        %1165 = vmatpush1.bf16.msra.mxu0 %v1141
        %1166 = vmatprep.subr.bf16.mxu0 0
        %1167 = vmatpush1.bf16.msra.mxu0 0
        %1168 = vmatprep.subr.bf16.mxu0 0
        %1169 = vmatpush1.bf16.msra.mxu0 0
        %1170 = vmatprep.subr.bf16.mxu0 0
        %1171 = vmatpush1.bf16.msra.mxu0 0
        %1172 = vmatprep.subr.bf16.mxu0 0
        %1173 = vmatpush1.bf16.msra.mxu0 0
        %1174 = vmatprep.subr.bf16.mxu0 0
        %1175 = vmatpush1.bf16.msra.mxu0 0
        %1176 = vmatprep.subr.bf16.mxu0 0
        %1177 = vmatpush1.bf16.msra.mxu0 0
        %1178 = vmatprep.subr.bf16.mxu0 0
        %1179 = vmatpush1.bf16.msra.mxu0 0
        %1180 = vmatprep.subr.bf16.mxu0 0
        %1181 = vmatpush1.bf16.msra.mxu0 0
        %1182 = vmatprep.mubr.bf16.mxu0 0
        %1183 = vmatmul.mubr.bf16.gmra.mrb[0].mxu0 %v1100
        %v1184 = vpop.f32.mrb[0].mxu0
        %v1185 = vadd.f32 0.0, %v1184
        %v1186 = vpop.f32.mrb[0].mxu0
        %v1187 = vpop.f32.mrb[0].mxu0
        %v1188 = vpop.f32.mrb[0].mxu0
        %1189 = vdwg.mxu0
        %v1190 = vadd.f32 %v1082, %v1185
        %s1191 = scalar_lea.vmem %s254, 448 [#allocation8]
        %v1192 = vld [vmem:[%s1191] sm:$0xf]
        %v1193 = vld [vmem:[%s1191 + $0x4] sm:$0xf]
        %v1194 = vld [vmem:[%s1191 + $0x8] sm:$0xf]
        %v1195 = vld [vmem:[%s1191 + $0xc] sm:$0xf]
        %v1196 = vld [vmem:[%s1191 + $0x10] sm:$0xf]
        %v1197 = vld [vmem:[%s1191 + $0x14] sm:$0xf]
        %v1198 = vld [vmem:[%s1191 + $0x18] sm:$0xf]
        %v1199 = vld [vmem:[%s1191 + $0x1c] sm:$0xf]
        %v1200 = vld [vmem:[%s1191 + $0x20] sm:$0xf]
        %v1201 = vld [vmem:[%s1191 + $0x24] sm:$0xf]
        %v1202 = vld [vmem:[%s1191 + $0x28] sm:$0xf]
        %v1203 = vld [vmem:[%s1191 + $0x2c] sm:$0xf]
        %v1204 = vld [vmem:[%s1191 + $0x30] sm:$0xf]
        %v1205 = vld [vmem:[%s1191 + $0x34] sm:$0xf]
        %v1206 = vld [vmem:[%s1191 + $0x38] sm:$0xf]
        %v1207 = vld [vmem:[%s1191 + $0x3c] sm:$0xf]
        %v1208 = vrot.slane %v867, 3
        %v1226 = vunpack.c.l.b16 %v1192
        %v1227 = vunpack.c.l.b16 %v1193
        %v1228 = vunpack.c.l.b16 %v1194
        %v1229 = vunpack.c.l.b16 %v1195
        %v1230 = vunpack.c.l.b16 %v1196
        %v1231 = vunpack.c.l.b16 %v1197
        %v1232 = vunpack.c.l.b16 %v1198
        %v1233 = vunpack.c.l.b16 %v1199
        %v1234 = vunpack.c.l.b16 %v1200
        %v1235 = vunpack.c.l.b16 %v1201
        %v1236 = vunpack.c.l.b16 %v1202
        %v1237 = vunpack.c.l.b16 %v1203
        %v1238 = vunpack.c.l.b16 %v1204
        %v1239 = vunpack.c.l.b16 %v1205
        %v1240 = vunpack.c.l.b16 %v1206
        %v1241 = vunpack.c.l.b16 %v1207
        %v1242 = vpack.c.b16 %v1227, %v1226
        %v1243 = vpack.c.b16 %v1229, %v1228
        %v1244 = vpack.c.b16 %v1231, %v1230
        %v1245 = vpack.c.b16 %v1233, %v1232
        %v1246 = vpack.c.b16 %v1235, %v1234
        %v1247 = vpack.c.b16 %v1237, %v1236
        %v1248 = vpack.c.b16 %v1239, %v1238
        %v1249 = vpack.c.b16 %v1241, %v1240
        %1258 = vmatprep.subr.bf16.mxu0 0
        %1259 = vmatpush1.bf16.msra.mxu0 %v1242
        %1260 = vmatprep.subr.bf16.mxu0 0
        %1261 = vmatpush1.bf16.msra.mxu0 %v1243
        %1262 = vmatprep.subr.bf16.mxu0 0
        %1263 = vmatpush1.bf16.msra.mxu0 %v1244
        %1264 = vmatprep.subr.bf16.mxu0 0
        %1265 = vmatpush1.bf16.msra.mxu0 %v1245
        %1266 = vmatprep.subr.bf16.mxu0 0
        %1267 = vmatpush1.bf16.msra.mxu0 %v1246
        %1268 = vmatprep.subr.bf16.mxu0 0
        %1269 = vmatpush1.bf16.msra.mxu0 %v1247
        %1270 = vmatprep.subr.bf16.mxu0 0
        %1271 = vmatpush1.bf16.msra.mxu0 %v1248
        %1272 = vmatprep.subr.bf16.mxu0 0
        %1273 = vmatpush1.bf16.msra.mxu0 %v1249
        %1274 = vmatprep.subr.bf16.mxu0 0
        %1275 = vmatpush1.bf16.msra.mxu0 0
        %1276 = vmatprep.subr.bf16.mxu0 0
        %1277 = vmatpush1.bf16.msra.mxu0 0
        %1278 = vmatprep.subr.bf16.mxu0 0
        %1279 = vmatpush1.bf16.msra.mxu0 0
        %1280 = vmatprep.subr.bf16.mxu0 0
        %1281 = vmatpush1.bf16.msra.mxu0 0
        %1282 = vmatprep.subr.bf16.mxu0 0
        %1283 = vmatpush1.bf16.msra.mxu0 0
        %1284 = vmatprep.subr.bf16.mxu0 0
        %1285 = vmatpush1.bf16.msra.mxu0 0
        %1286 = vmatprep.subr.bf16.mxu0 0
        %1287 = vmatpush1.bf16.msra.mxu0 0
        %1288 = vmatprep.subr.bf16.mxu0 0
        %1289 = vmatpush1.bf16.msra.mxu0 0
        %1290 = vmatprep.mubr.bf16.mxu0 0
        %1291 = vmatmul.mubr.bf16.gmra.mrb[0].mxu0 %v1208
        %v1292 = vpop.f32.mrb[0].mxu0
        %v1293 = vadd.f32 0.0, %v1292
        %v1294 = vpop.f32.mrb[0].mxu0
        %v1295 = vpop.f32.mrb[0].mxu0
        %v1296 = vpop.f32.mrb[0].mxu0
        %1297 = vdwg.mxu0
        %v1298 = vadd.f32 %v1190, %v1293
        %v1299 = vpack.c.bf16 %v436, %v436
        %s1300 = scalar_lea.vmem %s254, 512 [#allocation8]
        %v1301 = vld [vmem:[%s1300] sm:$0xf]
        %v1302 = vld [vmem:[%s1300 + $0x4] sm:$0xf]
        %v1303 = vld [vmem:[%s1300 + $0x8] sm:$0xf]
        %v1304 = vld [vmem:[%s1300 + $0xc] sm:$0xf]
        %v1305 = vld [vmem:[%s1300 + $0x10] sm:$0xf]
        %v1306 = vld [vmem:[%s1300 + $0x14] sm:$0xf]
        %v1307 = vld [vmem:[%s1300 + $0x18] sm:$0xf]
        %v1308 = vld [vmem:[%s1300 + $0x1c] sm:$0xf]
        %v1309 = vld [vmem:[%s1300 + $0x20] sm:$0xf]
        %v1310 = vld [vmem:[%s1300 + $0x24] sm:$0xf]
        %v1311 = vld [vmem:[%s1300 + $0x28] sm:$0xf]
        %v1312 = vld [vmem:[%s1300 + $0x2c] sm:$0xf]
        %v1313 = vld [vmem:[%s1300 + $0x30] sm:$0xf]
        %v1314 = vld [vmem:[%s1300 + $0x34] sm:$0xf]
        %v1315 = vld [vmem:[%s1300 + $0x38] sm:$0xf]
        %v1316 = vld [vmem:[%s1300 + $0x3c] sm:$0xf]
        %v1333 = vunpack.c.l.b16 %v1301
        %v1334 = vunpack.c.l.b16 %v1302
        %v1335 = vunpack.c.l.b16 %v1303
        %v1336 = vunpack.c.l.b16 %v1304
        %v1337 = vunpack.c.l.b16 %v1305
        %v1338 = vunpack.c.l.b16 %v1306
        %v1339 = vunpack.c.l.b16 %v1307
        %v1340 = vunpack.c.l.b16 %v1308
        %v1341 = vunpack.c.l.b16 %v1309
        %v1342 = vunpack.c.l.b16 %v1310
        %v1343 = vunpack.c.l.b16 %v1311
        %v1344 = vunpack.c.l.b16 %v1312
        %v1345 = vunpack.c.l.b16 %v1313
        %v1346 = vunpack.c.l.b16 %v1314
        %v1347 = vunpack.c.l.b16 %v1315
        %v1348 = vunpack.c.l.b16 %v1316
        %v1349 = vpack.c.b16 %v1334, %v1333
        %v1350 = vpack.c.b16 %v1336, %v1335
        %v1351 = vpack.c.b16 %v1338, %v1337
        %v1352 = vpack.c.b16 %v1340, %v1339
        %v1353 = vpack.c.b16 %v1342, %v1341
        %v1354 = vpack.c.b16 %v1344, %v1343
        %v1355 = vpack.c.b16 %v1346, %v1345
        %v1356 = vpack.c.b16 %v1348, %v1347
        %1365 = vmatprep.subr.bf16.mxu0 0
        %1366 = vmatpush1.bf16.msra.mxu0 %v1349
        %1367 = vmatprep.subr.bf16.mxu0 0
        %1368 = vmatpush1.bf16.msra.mxu0 %v1350
        %1369 = vmatprep.subr.bf16.mxu0 0
        %1370 = vmatpush1.bf16.msra.mxu0 %v1351
        %1371 = vmatprep.subr.bf16.mxu0 0
        %1372 = vmatpush1.bf16.msra.mxu0 %v1352
        %1373 = vmatprep.subr.bf16.mxu0 0
        %1374 = vmatpush1.bf16.msra.mxu0 %v1353
        %1375 = vmatprep.subr.bf16.mxu0 0
        %1376 = vmatpush1.bf16.msra.mxu0 %v1354
        %1377 = vmatprep.subr.bf16.mxu0 0
        %1378 = vmatpush1.bf16.msra.mxu0 %v1355
        %1379 = vmatprep.subr.bf16.mxu0 0
        %1380 = vmatpush1.bf16.msra.mxu0 %v1356
        %1381 = vmatprep.subr.bf16.mxu0 0
        %1382 = vmatpush1.bf16.msra.mxu0 0
        %1383 = vmatprep.subr.bf16.mxu0 0
        %1384 = vmatpush1.bf16.msra.mxu0 0
        %1385 = vmatprep.subr.bf16.mxu0 0
        %1386 = vmatpush1.bf16.msra.mxu0 0
        %1387 = vmatprep.subr.bf16.mxu0 0
        %1388 = vmatpush1.bf16.msra.mxu0 0
        %1389 = vmatprep.subr.bf16.mxu0 0
        %1390 = vmatpush1.bf16.msra.mxu0 0
        %1391 = vmatprep.subr.bf16.mxu0 0
        %1392 = vmatpush1.bf16.msra.mxu0 0
        %1393 = vmatprep.subr.bf16.mxu0 0
        %1394 = vmatpush1.bf16.msra.mxu0 0
        %1395 = vmatprep.subr.bf16.mxu0 0
        %1396 = vmatpush1.bf16.msra.mxu0 0
        %1397 = vmatprep.mubr.bf16.mxu0 0
        %1398 = vmatmul.mubr.bf16.gmra.mrb[0].mxu0 %v1299
        %v1399 = vpop.f32.mrb[0].mxu0
        %v1400 = vadd.f32 0.0, %v1399
        %v1401 = vpop.f32.mrb[0].mxu0
        %v1402 = vpop.f32.mrb[0].mxu0
        %v1403 = vpop.f32.mrb[0].mxu0
        %1404 = vdwg.mxu0
        %v1405 = vadd.f32 %v1298, %v1400
        %s1406 = scalar_lea.vmem %s254, 576 [#allocation8]
        %v1407 = vld [vmem:[%s1406] sm:$0xf]
        %v1408 = vld [vmem:[%s1406 + $0x4] sm:$0xf]
        %v1409 = vld [vmem:[%s1406 + $0x8] sm:$0xf]
        %v1410 = vld [vmem:[%s1406 + $0xc] sm:$0xf]
        %v1411 = vld [vmem:[%s1406 + $0x10] sm:$0xf]
        %v1412 = vld [vmem:[%s1406 + $0x14] sm:$0xf]
        %v1413 = vld [vmem:[%s1406 + $0x18] sm:$0xf]
        %v1414 = vld [vmem:[%s1406 + $0x1c] sm:$0xf]
        %v1415 = vld [vmem:[%s1406 + $0x20] sm:$0xf]
        %v1416 = vld [vmem:[%s1406 + $0x24] sm:$0xf]
        %v1417 = vld [vmem:[%s1406 + $0x28] sm:$0xf]
        %v1418 = vld [vmem:[%s1406 + $0x2c] sm:$0xf]
        %v1419 = vld [vmem:[%s1406 + $0x30] sm:$0xf]
        %v1420 = vld [vmem:[%s1406 + $0x34] sm:$0xf]
        %v1421 = vld [vmem:[%s1406 + $0x38] sm:$0xf]
        %v1422 = vld [vmem:[%s1406 + $0x3c] sm:$0xf]
        %v1424 = vrot.slane %v1299, 1
        %v1442 = vunpack.c.l.b16 %v1407
        %v1443 = vunpack.c.l.b16 %v1408
        %v1444 = vunpack.c.l.b16 %v1409
        %v1445 = vunpack.c.l.b16 %v1410
        %v1446 = vunpack.c.l.b16 %v1411
        %v1447 = vunpack.c.l.b16 %v1412
        %v1448 = vunpack.c.l.b16 %v1413
        %v1449 = vunpack.c.l.b16 %v1414
        %v1450 = vunpack.c.l.b16 %v1415
        %v1451 = vunpack.c.l.b16 %v1416
        %v1452 = vunpack.c.l.b16 %v1417
        %v1453 = vunpack.c.l.b16 %v1418
        %v1454 = vunpack.c.l.b16 %v1419
        %v1455 = vunpack.c.l.b16 %v1420
        %v1456 = vunpack.c.l.b16 %v1421
        %v1457 = vunpack.c.l.b16 %v1422
        %v1458 = vpack.c.b16 %v1443, %v1442
        %v1459 = vpack.c.b16 %v1445, %v1444
        %v1460 = vpack.c.b16 %v1447, %v1446
        %v1461 = vpack.c.b16 %v1449, %v1448
        %v1462 = vpack.c.b16 %v1451, %v1450
        %v1463 = vpack.c.b16 %v1453, %v1452
        %v1464 = vpack.c.b16 %v1455, %v1454
        %v1465 = vpack.c.b16 %v1457, %v1456
        %1474 = vmatprep.subr.bf16.mxu0 0
        %1475 = vmatpush1.bf16.msra.mxu0 %v1458
        %1476 = vmatprep.subr.bf16.mxu0 0
        %1477 = vmatpush1.bf16.msra.mxu0 %v1459
        %1478 = vmatprep.subr.bf16.mxu0 0
        %1479 = vmatpush1.bf16.msra.mxu0 %v1460
        %1480 = vmatprep.subr.bf16.mxu0 0
        %1481 = vmatpush1.bf16.msra.mxu0 %v1461
        %1482 = vmatprep.subr.bf16.mxu0 0
        %1483 = vmatpush1.bf16.msra.mxu0 %v1462
        %1484 = vmatprep.subr.bf16.mxu0 0
        %1485 = vmatpush1.bf16.msra.mxu0 %v1463
        %1486 = vmatprep.subr.bf16.mxu0 0
        %1487 = vmatpush1.bf16.msra.mxu0 %v1464
        %1488 = vmatprep.subr.bf16.mxu0 0
        %1489 = vmatpush1.bf16.msra.mxu0 %v1465
        %1490 = vmatprep.subr.bf16.mxu0 0
        %1491 = vmatpush1.bf16.msra.mxu0 0
        %1492 = vmatprep.subr.bf16.mxu0 0
        %1493 = vmatpush1.bf16.msra.mxu0 0
        %1494 = vmatprep.subr.bf16.mxu0 0
        %1495 = vmatpush1.bf16.msra.mxu0 0
        %1496 = vmatprep.subr.bf16.mxu0 0
        %1497 = vmatpush1.bf16.msra.mxu0 0
        %1498 = vmatprep.subr.bf16.mxu0 0
        %1499 = vmatpush1.bf16.msra.mxu0 0
        %1500 = vmatprep.subr.bf16.mxu0 0
        %1501 = vmatpush1.bf16.msra.mxu0 0
        %1502 = vmatprep.subr.bf16.mxu0 0
        %1503 = vmatpush1.bf16.msra.mxu0 0
        %1504 = vmatprep.subr.bf16.mxu0 0
        %1505 = vmatpush1.bf16.msra.mxu0 0
        %1506 = vmatprep.mubr.bf16.mxu0 0
        %1507 = vmatmul.mubr.bf16.gmra.mrb[0].mxu0 %v1424
        %v1508 = vpop.f32.mrb[0].mxu0
        %v1509 = vadd.f32 0.0, %v1508
        %v1510 = vpop.f32.mrb[0].mxu0
        %v1511 = vpop.f32.mrb[0].mxu0
        %v1512 = vpop.f32.mrb[0].mxu0
        %1513 = vdwg.mxu0
        %v1514 = vadd.f32 %v1405, %v1509
        %s1515 = scalar_lea.vmem %s254, 640 [#allocation8]
        %v1516 = vld [vmem:[%s1515] sm:$0xf]
        %v1517 = vld [vmem:[%s1515 + $0x4] sm:$0xf]
        %v1518 = vld [vmem:[%s1515 + $0x8] sm:$0xf]
        %v1519 = vld [vmem:[%s1515 + $0xc] sm:$0xf]
        %v1520 = vld [vmem:[%s1515 + $0x10] sm:$0xf]
        %v1521 = vld [vmem:[%s1515 + $0x14] sm:$0xf]
        %v1522 = vld [vmem:[%s1515 + $0x18] sm:$0xf]
        %v1523 = vld [vmem:[%s1515 + $0x1c] sm:$0xf]
        %v1524 = vld [vmem:[%s1515 + $0x20] sm:$0xf]
        %v1525 = vld [vmem:[%s1515 + $0x24] sm:$0xf]
        %v1526 = vld [vmem:[%s1515 + $0x28] sm:$0xf]
        %v1527 = vld [vmem:[%s1515 + $0x2c] sm:$0xf]
        %v1528 = vld [vmem:[%s1515 + $0x30] sm:$0xf]
        %v1529 = vld [vmem:[%s1515 + $0x34] sm:$0xf]
        %v1530 = vld [vmem:[%s1515 + $0x38] sm:$0xf]
        %v1531 = vld [vmem:[%s1515 + $0x3c] sm:$0xf]
        %v1532 = vrot.slane %v1299, 2
        %v1550 = vunpack.c.l.b16 %v1516
        %v1551 = vunpack.c.l.b16 %v1517
        %v1552 = vunpack.c.l.b16 %v1518
        %v1553 = vunpack.c.l.b16 %v1519
        %v1554 = vunpack.c.l.b16 %v1520
        %v1555 = vunpack.c.l.b16 %v1521
        %v1556 = vunpack.c.l.b16 %v1522
        %v1557 = vunpack.c.l.b16 %v1523
        %v1558 = vunpack.c.l.b16 %v1524
        %v1559 = vunpack.c.l.b16 %v1525
        %v1560 = vunpack.c.l.b16 %v1526
        %v1561 = vunpack.c.l.b16 %v1527
        %v1562 = vunpack.c.l.b16 %v1528
        %v1563 = vunpack.c.l.b16 %v1529
        %v1564 = vunpack.c.l.b16 %v1530
        %v1565 = vunpack.c.l.b16 %v1531
        %v1566 = vpack.c.b16 %v1551, %v1550
        %v1567 = vpack.c.b16 %v1553, %v1552
        %v1568 = vpack.c.b16 %v1555, %v1554
        %v1569 = vpack.c.b16 %v1557, %v1556
        %v1570 = vpack.c.b16 %v1559, %v1558
        %v1571 = vpack.c.b16 %v1561, %v1560
        %v1572 = vpack.c.b16 %v1563, %v1562
        %v1573 = vpack.c.b16 %v1565, %v1564
        %1582 = vmatprep.subr.bf16.mxu0 0
        %1583 = vmatpush1.bf16.msra.mxu0 %v1566
        %1584 = vmatprep.subr.bf16.mxu0 0
        %1585 = vmatpush1.bf16.msra.mxu0 %v1567
        %1586 = vmatprep.subr.bf16.mxu0 0
        %1587 = vmatpush1.bf16.msra.mxu0 %v1568
        %1588 = vmatprep.subr.bf16.mxu0 0
        %1589 = vmatpush1.bf16.msra.mxu0 %v1569
        %1590 = vmatprep.subr.bf16.mxu0 0
        %1591 = vmatpush1.bf16.msra.mxu0 %v1570
        %1592 = vmatprep.subr.bf16.mxu0 0
        %1593 = vmatpush1.bf16.msra.mxu0 %v1571
        %1594 = vmatprep.subr.bf16.mxu0 0
        %1595 = vmatpush1.bf16.msra.mxu0 %v1572
        %1596 = vmatprep.subr.bf16.mxu0 0
        %1597 = vmatpush1.bf16.msra.mxu0 %v1573
        %1598 = vmatprep.subr.bf16.mxu0 0
        %1599 = vmatpush1.bf16.msra.mxu0 0
        %1600 = vmatprep.subr.bf16.mxu0 0
        %1601 = vmatpush1.bf16.msra.mxu0 0
        %1602 = vmatprep.subr.bf16.mxu0 0
        %1603 = vmatpush1.bf16.msra.mxu0 0
        %1604 = vmatprep.subr.bf16.mxu0 0
        %1605 = vmatpush1.bf16.msra.mxu0 0
        %1606 = vmatprep.subr.bf16.mxu0 0
        %1607 = vmatpush1.bf16.msra.mxu0 0
        %1608 = vmatprep.subr.bf16.mxu0 0
        %1609 = vmatpush1.bf16.msra.mxu0 0
        %1610 = vmatprep.subr.bf16.mxu0 0
        %1611 = vmatpush1.bf16.msra.mxu0 0
        %1612 = vmatprep.subr.bf16.mxu0 0
        %1613 = vmatpush1.bf16.msra.mxu0 0
        %1614 = vmatprep.mubr.bf16.mxu0 0
        %1615 = vmatmul.mubr.bf16.gmra.mrb[0].mxu0 %v1532
        %v1616 = vpop.f32.mrb[0].mxu0
        %v1617 = vadd.f32 0.0, %v1616
        %v1618 = vpop.f32.mrb[0].mxu0
        %v1619 = vpop.f32.mrb[0].mxu0
        %v1620 = vpop.f32.mrb[0].mxu0
        %1621 = vdwg.mxu0
        %v1622 = vadd.f32 %v1514, %v1617
        %s1623 = scalar_lea.vmem %s254, 704 [#allocation8]
        %v1624 = vld [vmem:[%s1623] sm:$0xf]
        %v1625 = vld [vmem:[%s1623 + $0x4] sm:$0xf]
        %v1626 = vld [vmem:[%s1623 + $0x8] sm:$0xf]
        %v1627 = vld [vmem:[%s1623 + $0xc] sm:$0xf]
        %v1628 = vld [vmem:[%s1623 + $0x10] sm:$0xf]
        %v1629 = vld [vmem:[%s1623 + $0x14] sm:$0xf]
        %v1630 = vld [vmem:[%s1623 + $0x18] sm:$0xf]
        %v1631 = vld [vmem:[%s1623 + $0x1c] sm:$0xf]
        %v1632 = vld [vmem:[%s1623 + $0x20] sm:$0xf]
        %v1633 = vld [vmem:[%s1623 + $0x24] sm:$0xf]
        %v1634 = vld [vmem:[%s1623 + $0x28] sm:$0xf]
        %v1635 = vld [vmem:[%s1623 + $0x2c] sm:$0xf]
        %v1636 = vld [vmem:[%s1623 + $0x30] sm:$0xf]
        %v1637 = vld [vmem:[%s1623 + $0x34] sm:$0xf]
        %v1638 = vld [vmem:[%s1623 + $0x38] sm:$0xf]
        %v1639 = vld [vmem:[%s1623 + $0x3c] sm:$0xf]
        %v1640 = vrot.slane %v1299, 3
        %v1658 = vunpack.c.l.b16 %v1624
        %v1659 = vunpack.c.l.b16 %v1625
        %v1660 = vunpack.c.l.b16 %v1626
        %v1661 = vunpack.c.l.b16 %v1627
        %v1662 = vunpack.c.l.b16 %v1628
        %v1663 = vunpack.c.l.b16 %v1629
        %v1664 = vunpack.c.l.b16 %v1630
        %v1665 = vunpack.c.l.b16 %v1631
        %v1666 = vunpack.c.l.b16 %v1632
        %v1667 = vunpack.c.l.b16 %v1633
        %v1668 = vunpack.c.l.b16 %v1634
        %v1669 = vunpack.c.l.b16 %v1635
        %v1670 = vunpack.c.l.b16 %v1636
        %v1671 = vunpack.c.l.b16 %v1637
        %v1672 = vunpack.c.l.b16 %v1638
        %v1673 = vunpack.c.l.b16 %v1639
        %v1674 = vpack.c.b16 %v1659, %v1658
        %v1675 = vpack.c.b16 %v1661, %v1660
        %v1676 = vpack.c.b16 %v1663, %v1662
        %v1677 = vpack.c.b16 %v1665, %v1664
        %v1678 = vpack.c.b16 %v1667, %v1666
        %v1679 = vpack.c.b16 %v1669, %v1668
        %v1680 = vpack.c.b16 %v1671, %v1670
        %v1681 = vpack.c.b16 %v1673, %v1672
        %1690 = vmatprep.subr.bf16.mxu0 0
        %1691 = vmatpush1.bf16.msra.mxu0 %v1674
        %1692 = vmatprep.subr.bf16.mxu0 0
        %1693 = vmatpush1.bf16.msra.mxu0 %v1675
        %1694 = vmatprep.subr.bf16.mxu0 0
        %1695 = vmatpush1.bf16.msra.mxu0 %v1676
        %1696 = vmatprep.subr.bf16.mxu0 0
        %1697 = vmatpush1.bf16.msra.mxu0 %v1677
        %1698 = vmatprep.subr.bf16.mxu0 0
        %1699 = vmatpush1.bf16.msra.mxu0 %v1678
        %1700 = vmatprep.subr.bf16.mxu0 0
        %1701 = vmatpush1.bf16.msra.mxu0 %v1679
        %1702 = vmatprep.subr.bf16.mxu0 0
        %1703 = vmatpush1.bf16.msra.mxu0 %v1680
        %1704 = vmatprep.subr.bf16.mxu0 0
        %1705 = vmatpush1.bf16.msra.mxu0 %v1681
        %1706 = vmatprep.subr.bf16.mxu0 0
        %1707 = vmatpush1.bf16.msra.mxu0 0
        %1708 = vmatprep.subr.bf16.mxu0 0
        %1709 = vmatpush1.bf16.msra.mxu0 0
        %1710 = vmatprep.subr.bf16.mxu0 0
        %1711 = vmatpush1.bf16.msra.mxu0 0
        %1712 = vmatprep.subr.bf16.mxu0 0
        %1713 = vmatpush1.bf16.msra.mxu0 0
        %1714 = vmatprep.subr.bf16.mxu0 0
        %1715 = vmatpush1.bf16.msra.mxu0 0
        %1716 = vmatprep.subr.bf16.mxu0 0
        %1717 = vmatpush1.bf16.msra.mxu0 0
        %1718 = vmatprep.subr.bf16.mxu0 0
        %1719 = vmatpush1.bf16.msra.mxu0 0
        %1720 = vmatprep.subr.bf16.mxu0 0
        %1721 = vmatpush1.bf16.msra.mxu0 0
        %1722 = vmatprep.mubr.bf16.mxu0 0
        %1723 = vmatmul.mubr.bf16.gmra.mrb[0].mxu0 %v1640
        %v1724 = vpop.f32.mrb[0].mxu0
        %v1725 = vadd.f32 0.0, %v1724
        %v1726 = vpop.f32.mrb[0].mxu0
        %v1727 = vpop.f32.mrb[0].mxu0
        %v1728 = vpop.f32.mrb[0].mxu0
        %1729 = vdwg.mxu0
        %v1730 = vadd.f32 %v1622, %v1725
        %v1731 = vpack.c.bf16 %v437, %v437
        %s1732 = scalar_lea.vmem %s254, 768 [#allocation8]
        %v1733 = vld [vmem:[%s1732] sm:$0xf]
        %v1734 = vld [vmem:[%s1732 + $0x4] sm:$0xf]
        %v1735 = vld [vmem:[%s1732 + $0x8] sm:$0xf]
        %v1736 = vld [vmem:[%s1732 + $0xc] sm:$0xf]
        %v1737 = vld [vmem:[%s1732 + $0x10] sm:$0xf]
        %v1738 = vld [vmem:[%s1732 + $0x14] sm:$0xf]
        %v1739 = vld [vmem:[%s1732 + $0x18] sm:$0xf]
        %v1740 = vld [vmem:[%s1732 + $0x1c] sm:$0xf]
        %v1741 = vld [vmem:[%s1732 + $0x20] sm:$0xf]
        %v1742 = vld [vmem:[%s1732 + $0x24] sm:$0xf]
        %v1743 = vld [vmem:[%s1732 + $0x28] sm:$0xf]
        %v1744 = vld [vmem:[%s1732 + $0x2c] sm:$0xf]
        %v1745 = vld [vmem:[%s1732 + $0x30] sm:$0xf]
        %v1746 = vld [vmem:[%s1732 + $0x34] sm:$0xf]
        %v1747 = vld [vmem:[%s1732 + $0x38] sm:$0xf]
        %v1748 = vld [vmem:[%s1732 + $0x3c] sm:$0xf]
        %v1765 = vunpack.c.l.b16 %v1733
        %v1766 = vunpack.c.l.b16 %v1734
        %v1767 = vunpack.c.l.b16 %v1735
        %v1768 = vunpack.c.l.b16 %v1736
        %v1769 = vunpack.c.l.b16 %v1737
        %v1770 = vunpack.c.l.b16 %v1738
        %v1771 = vunpack.c.l.b16 %v1739
        %v1772 = vunpack.c.l.b16 %v1740
        %v1773 = vunpack.c.l.b16 %v1741
        %v1774 = vunpack.c.l.b16 %v1742
        %v1775 = vunpack.c.l.b16 %v1743
        %v1776 = vunpack.c.l.b16 %v1744
        %v1777 = vunpack.c.l.b16 %v1745
        %v1778 = vunpack.c.l.b16 %v1746
        %v1779 = vunpack.c.l.b16 %v1747
        %v1780 = vunpack.c.l.b16 %v1748
        %v1781 = vpack.c.b16 %v1766, %v1765
        %v1782 = vpack.c.b16 %v1768, %v1767
        %v1783 = vpack.c.b16 %v1770, %v1769
        %v1784 = vpack.c.b16 %v1772, %v1771
        %v1785 = vpack.c.b16 %v1774, %v1773
        %v1786 = vpack.c.b16 %v1776, %v1775
        %v1787 = vpack.c.b16 %v1778, %v1777
        %v1788 = vpack.c.b16 %v1780, %v1779
        %1797 = vmatprep.subr.bf16.mxu0 0
        %1798 = vmatpush1.bf16.msra.mxu0 %v1781
        %1799 = vmatprep.subr.bf16.mxu0 0
        %1800 = vmatpush1.bf16.msra.mxu0 %v1782
        %1801 = vmatprep.subr.bf16.mxu0 0
        %1802 = vmatpush1.bf16.msra.mxu0 %v1783
        %1803 = vmatprep.subr.bf16.mxu0 0
        %1804 = vmatpush1.bf16.msra.mxu0 %v1784
        %1805 = vmatprep.subr.bf16.mxu0 0
        %1806 = vmatpush1.bf16.msra.mxu0 %v1785
        %1807 = vmatprep.subr.bf16.mxu0 0
        %1808 = vmatpush1.bf16.msra.mxu0 %v1786
        %1809 = vmatprep.subr.bf16.mxu0 0
        %1810 = vmatpush1.bf16.msra.mxu0 %v1787
        %1811 = vmatprep.subr.bf16.mxu0 0
        %1812 = vmatpush1.bf16.msra.mxu0 %v1788
        %1813 = vmatprep.subr.bf16.mxu0 0
        %1814 = vmatpush1.bf16.msra.mxu0 0
        %1815 = vmatprep.subr.bf16.mxu0 0
        %1816 = vmatpush1.bf16.msra.mxu0 0
        %1817 = vmatprep.subr.bf16.mxu0 0
        %1818 = vmatpush1.bf16.msra.mxu0 0
        %1819 = vmatprep.subr.bf16.mxu0 0
        %1820 = vmatpush1.bf16.msra.mxu0 0
        %1821 = vmatprep.subr.bf16.mxu0 0
        %1822 = vmatpush1.bf16.msra.mxu0 0
        %1823 = vmatprep.subr.bf16.mxu0 0
        %1824 = vmatpush1.bf16.msra.mxu0 0
        %1825 = vmatprep.subr.bf16.mxu0 0
        %1826 = vmatpush1.bf16.msra.mxu0 0
        %1827 = vmatprep.subr.bf16.mxu0 0
        %1828 = vmatpush1.bf16.msra.mxu0 0
        %1829 = vmatprep.mubr.bf16.mxu0 0
        %1830 = vmatmul.mubr.bf16.gmra.mrb[0].mxu0 %v1731
        %v1831 = vpop.f32.mrb[0].mxu0
        %v1832 = vadd.f32 0.0, %v1831
        %v1833 = vpop.f32.mrb[0].mxu0
        %v1834 = vpop.f32.mrb[0].mxu0
        %v1835 = vpop.f32.mrb[0].mxu0
        %1836 = vdwg.mxu0
        %v1837 = vadd.f32 %v1730, %v1832
        %s1838 = scalar_lea.vmem %s254, 832 [#allocation8]
        %v1839 = vld [vmem:[%s1838] sm:$0xf]
        %v1840 = vld [vmem:[%s1838 + $0x4] sm:$0xf]
        %v1841 = vld [vmem:[%s1838 + $0x8] sm:$0xf]
        %v1842 = vld [vmem:[%s1838 + $0xc] sm:$0xf]
        %v1843 = vld [vmem:[%s1838 + $0x10] sm:$0xf]
        %v1844 = vld [vmem:[%s1838 + $0x14] sm:$0xf]
        %v1845 = vld [vmem:[%s1838 + $0x18] sm:$0xf]
        %v1846 = vld [vmem:[%s1838 + $0x1c] sm:$0xf]
        %v1847 = vld [vmem:[%s1838 + $0x20] sm:$0xf]
        %v1848 = vld [vmem:[%s1838 + $0x24] sm:$0xf]
        %v1849 = vld [vmem:[%s1838 + $0x28] sm:$0xf]
        %v1850 = vld [vmem:[%s1838 + $0x2c] sm:$0xf]
        %v1851 = vld [vmem:[%s1838 + $0x30] sm:$0xf]
        %v1852 = vld [vmem:[%s1838 + $0x34] sm:$0xf]
        %v1853 = vld [vmem:[%s1838 + $0x38] sm:$0xf]
        %v1854 = vld [vmem:[%s1838 + $0x3c] sm:$0xf]
        %v1856 = vrot.slane %v1731, 1
        %v1874 = vunpack.c.l.b16 %v1839
        %v1875 = vunpack.c.l.b16 %v1840
        %v1876 = vunpack.c.l.b16 %v1841
        %v1877 = vunpack.c.l.b16 %v1842
        %v1878 = vunpack.c.l.b16 %v1843
        %v1879 = vunpack.c.l.b16 %v1844
        %v1880 = vunpack.c.l.b16 %v1845
        %v1881 = vunpack.c.l.b16 %v1846
        %v1882 = vunpack.c.l.b16 %v1847
        %v1883 = vunpack.c.l.b16 %v1848
        %v1884 = vunpack.c.l.b16 %v1849
        %v1885 = vunpack.c.l.b16 %v1850
        %v1886 = vunpack.c.l.b16 %v1851
        %v1887 = vunpack.c.l.b16 %v1852
        %v1888 = vunpack.c.l.b16 %v1853
        %v1889 = vunpack.c.l.b16 %v1854
        %v1890 = vpack.c.b16 %v1875, %v1874
        %v1891 = vpack.c.b16 %v1877, %v1876
        %v1892 = vpack.c.b16 %v1879, %v1878
        %v1893 = vpack.c.b16 %v1881, %v1880
        %v1894 = vpack.c.b16 %v1883, %v1882
        %v1895 = vpack.c.b16 %v1885, %v1884
        %v1896 = vpack.c.b16 %v1887, %v1886
        %v1897 = vpack.c.b16 %v1889, %v1888
        %1906 = vmatprep.subr.bf16.mxu0 0
        %1907 = vmatpush1.bf16.msra.mxu0 %v1890
        %1908 = vmatprep.subr.bf16.mxu0 0
        %1909 = vmatpush1.bf16.msra.mxu0 %v1891
        %1910 = vmatprep.subr.bf16.mxu0 0
        %1911 = vmatpush1.bf16.msra.mxu0 %v1892
        %1912 = vmatprep.subr.bf16.mxu0 0
        %1913 = vmatpush1.bf16.msra.mxu0 %v1893
        %1914 = vmatprep.subr.bf16.mxu0 0
        %1915 = vmatpush1.bf16.msra.mxu0 %v1894
        %1916 = vmatprep.subr.bf16.mxu0 0
        %1917 = vmatpush1.bf16.msra.mxu0 %v1895
        %1918 = vmatprep.subr.bf16.mxu0 0
        %1919 = vmatpush1.bf16.msra.mxu0 %v1896
        %1920 = vmatprep.subr.bf16.mxu0 0
        %1921 = vmatpush1.bf16.msra.mxu0 %v1897
        %1922 = vmatprep.subr.bf16.mxu0 0
        %1923 = vmatpush1.bf16.msra.mxu0 0
        %1924 = vmatprep.subr.bf16.mxu0 0
        %1925 = vmatpush1.bf16.msra.mxu0 0
        %1926 = vmatprep.subr.bf16.mxu0 0
        %1927 = vmatpush1.bf16.msra.mxu0 0
        %1928 = vmatprep.subr.bf16.mxu0 0
        %1929 = vmatpush1.bf16.msra.mxu0 0
        %1930 = vmatprep.subr.bf16.mxu0 0
        %1931 = vmatpush1.bf16.msra.mxu0 0
        %1932 = vmatprep.subr.bf16.mxu0 0
        %1933 = vmatpush1.bf16.msra.mxu0 0
        %1934 = vmatprep.subr.bf16.mxu0 0
        %1935 = vmatpush1.bf16.msra.mxu0 0
        %1936 = vmatprep.subr.bf16.mxu0 0
        %1937 = vmatpush1.bf16.msra.mxu0 0
        %1938 = vmatprep.mubr.bf16.mxu0 0
        %1939 = vmatmul.mubr.bf16.gmra.mrb[0].mxu0 %v1856
        %v1940 = vpop.f32.mrb[0].mxu0
        %v1941 = vadd.f32 0.0, %v1940
        %v1942 = vpop.f32.mrb[0].mxu0
        %v1943 = vpop.f32.mrb[0].mxu0
        %v1944 = vpop.f32.mrb[0].mxu0
        %1945 = vdwg.mxu0
        %v1946 = vadd.f32 %v1837, %v1941
        %s1947 = scalar_lea.vmem %s254, 896 [#allocation8]
        %v1948 = vld [vmem:[%s1947] sm:$0xf]
        %v1949 = vld [vmem:[%s1947 + $0x4] sm:$0xf]
        %v1950 = vld [vmem:[%s1947 + $0x8] sm:$0xf]
        %v1951 = vld [vmem:[%s1947 + $0xc] sm:$0xf]
        %v1952 = vld [vmem:[%s1947 + $0x10] sm:$0xf]
        %v1953 = vld [vmem:[%s1947 + $0x14] sm:$0xf]
        %v1954 = vld [vmem:[%s1947 + $0x18] sm:$0xf]
        %v1955 = vld [vmem:[%s1947 + $0x1c] sm:$0xf]
        %v1956 = vld [vmem:[%s1947 + $0x20] sm:$0xf]
        %v1957 = vld [vmem:[%s1947 + $0x24] sm:$0xf]
        %v1958 = vld [vmem:[%s1947 + $0x28] sm:$0xf]
        %v1959 = vld [vmem:[%s1947 + $0x2c] sm:$0xf]
        %v1960 = vld [vmem:[%s1947 + $0x30] sm:$0xf]
        %v1961 = vld [vmem:[%s1947 + $0x34] sm:$0xf]
        %v1962 = vld [vmem:[%s1947 + $0x38] sm:$0xf]
        %v1963 = vld [vmem:[%s1947 + $0x3c] sm:$0xf]
        %v1964 = vrot.slane %v1731, 2
        %v1982 = vunpack.c.l.b16 %v1948
        %v1983 = vunpack.c.l.b16 %v1949
        %v1984 = vunpack.c.l.b16 %v1950
        %v1985 = vunpack.c.l.b16 %v1951
        %v1986 = vunpack.c.l.b16 %v1952
        %v1987 = vunpack.c.l.b16 %v1953
        %v1988 = vunpack.c.l.b16 %v1954
        %v1989 = vunpack.c.l.b16 %v1955
        %v1990 = vunpack.c.l.b16 %v1956
        %v1991 = vunpack.c.l.b16 %v1957
        %v1992 = vunpack.c.l.b16 %v1958
        %v1993 = vunpack.c.l.b16 %v1959
        %v1994 = vunpack.c.l.b16 %v1960
        %v1995 = vunpack.c.l.b16 %v1961
        %v1996 = vunpack.c.l.b16 %v1962
        %v1997 = vunpack.c.l.b16 %v1963
        %v1998 = vpack.c.b16 %v1983, %v1982
        %v1999 = vpack.c.b16 %v1985, %v1984
        %v2000 = vpack.c.b16 %v1987, %v1986
        %v2001 = vpack.c.b16 %v1989, %v1988
        %v2002 = vpack.c.b16 %v1991, %v1990
        %v2003 = vpack.c.b16 %v1993, %v1992
        %v2004 = vpack.c.b16 %v1995, %v1994
        %v2005 = vpack.c.b16 %v1997, %v1996
        %2014 = vmatprep.subr.bf16.mxu0 0
        %2015 = vmatpush1.bf16.msra.mxu0 %v1998
        %2016 = vmatprep.subr.bf16.mxu0 0
        %2017 = vmatpush1.bf16.msra.mxu0 %v1999
        %2018 = vmatprep.subr.bf16.mxu0 0
        %2019 = vmatpush1.bf16.msra.mxu0 %v2000
        %2020 = vmatprep.subr.bf16.mxu0 0
        %2021 = vmatpush1.bf16.msra.mxu0 %v2001
        %2022 = vmatprep.subr.bf16.mxu0 0
        %2023 = vmatpush1.bf16.msra.mxu0 %v2002
        %2024 = vmatprep.subr.bf16.mxu0 0
        %2025 = vmatpush1.bf16.msra.mxu0 %v2003
        %2026 = vmatprep.subr.bf16.mxu0 0
        %2027 = vmatpush1.bf16.msra.mxu0 %v2004
        %2028 = vmatprep.subr.bf16.mxu0 0
        %2029 = vmatpush1.bf16.msra.mxu0 %v2005
        %2030 = vmatprep.subr.bf16.mxu0 0
        %2031 = vmatpush1.bf16.msra.mxu0 0
        %2032 = vmatprep.subr.bf16.mxu0 0
        %2033 = vmatpush1.bf16.msra.mxu0 0
        %2034 = vmatprep.subr.bf16.mxu0 0
        %2035 = vmatpush1.bf16.msra.mxu0 0
        %2036 = vmatprep.subr.bf16.mxu0 0
        %2037 = vmatpush1.bf16.msra.mxu0 0
        %2038 = vmatprep.subr.bf16.mxu0 0
        %2039 = vmatpush1.bf16.msra.mxu0 0
        %2040 = vmatprep.subr.bf16.mxu0 0
        %2041 = vmatpush1.bf16.msra.mxu0 0
        %2042 = vmatprep.subr.bf16.mxu0 0
        %2043 = vmatpush1.bf16.msra.mxu0 0
        %2044 = vmatprep.subr.bf16.mxu0 0
        %2045 = vmatpush1.bf16.msra.mxu0 0
        %2046 = vmatprep.mubr.bf16.mxu0 0
        %2047 = vmatmul.mubr.bf16.gmra.mrb[0].mxu0 %v1964
        %v2048 = vpop.f32.mrb[0].mxu0
        %v2049 = vadd.f32 0.0, %v2048
        %v2050 = vpop.f32.mrb[0].mxu0
        %v2051 = vpop.f32.mrb[0].mxu0
        %v2052 = vpop.f32.mrb[0].mxu0
        %2053 = vdwg.mxu0
        %v2054 = vadd.f32 %v1946, %v2049
        %s2055 = scalar_lea.vmem %s254, 960 [#allocation8]
        %v2056 = vld [vmem:[%s2055] sm:$0xf]
        %v2057 = vld [vmem:[%s2055 + $0x4] sm:$0xf]
        %v2058 = vld [vmem:[%s2055 + $0x8] sm:$0xf]
        %v2059 = vld [vmem:[%s2055 + $0xc] sm:$0xf]
        %v2060 = vld [vmem:[%s2055 + $0x10] sm:$0xf]
        %v2061 = vld [vmem:[%s2055 + $0x14] sm:$0xf]
        %v2062 = vld [vmem:[%s2055 + $0x18] sm:$0xf]
        %v2063 = vld [vmem:[%s2055 + $0x1c] sm:$0xf]
        %v2064 = vld [vmem:[%s2055 + $0x20] sm:$0xf]
        %v2065 = vld [vmem:[%s2055 + $0x24] sm:$0xf]
        %v2066 = vld [vmem:[%s2055 + $0x28] sm:$0xf]
        %v2067 = vld [vmem:[%s2055 + $0x2c] sm:$0xf]
        %v2068 = vld [vmem:[%s2055 + $0x30] sm:$0xf]
        %v2069 = vld [vmem:[%s2055 + $0x34] sm:$0xf]
        %v2070 = vld [vmem:[%s2055 + $0x38] sm:$0xf]
        %v2071 = vld [vmem:[%s2055 + $0x3c] sm:$0xf]
        %v2072 = vrot.slane %v1731, 3
        %v2090 = vunpack.c.l.b16 %v2056
        %v2091 = vunpack.c.l.b16 %v2057
        %v2092 = vunpack.c.l.b16 %v2058
        %v2093 = vunpack.c.l.b16 %v2059
        %v2094 = vunpack.c.l.b16 %v2060
        %v2095 = vunpack.c.l.b16 %v2061
        %v2096 = vunpack.c.l.b16 %v2062
        %v2097 = vunpack.c.l.b16 %v2063
        %v2098 = vunpack.c.l.b16 %v2064
        %v2099 = vunpack.c.l.b16 %v2065
        %v2100 = vunpack.c.l.b16 %v2066
        %v2101 = vunpack.c.l.b16 %v2067
        %v2102 = vunpack.c.l.b16 %v2068
        %v2103 = vunpack.c.l.b16 %v2069
        %v2104 = vunpack.c.l.b16 %v2070
        %v2105 = vunpack.c.l.b16 %v2071
        %v2106 = vpack.c.b16 %v2091, %v2090
        %v2107 = vpack.c.b16 %v2093, %v2092
        %v2108 = vpack.c.b16 %v2095, %v2094
        %v2109 = vpack.c.b16 %v2097, %v2096
        %v2110 = vpack.c.b16 %v2099, %v2098
        %v2111 = vpack.c.b16 %v2101, %v2100
        %v2112 = vpack.c.b16 %v2103, %v2102
        %v2113 = vpack.c.b16 %v2105, %v2104
        %2122 = vmatprep.subr.bf16.mxu0 0
        %2123 = vmatpush1.bf16.msra.mxu0 %v2106
        %2124 = vmatprep.subr.bf16.mxu0 0
        %2125 = vmatpush1.bf16.msra.mxu0 %v2107
        %2126 = vmatprep.subr.bf16.mxu0 0
        %2127 = vmatpush1.bf16.msra.mxu0 %v2108
        %2128 = vmatprep.subr.bf16.mxu0 0
        %2129 = vmatpush1.bf16.msra.mxu0 %v2109
        %2130 = vmatprep.subr.bf16.mxu0 0
        %2131 = vmatpush1.bf16.msra.mxu0 %v2110
        %2132 = vmatprep.subr.bf16.mxu0 0
        %2133 = vmatpush1.bf16.msra.mxu0 %v2111
        %2134 = vmatprep.subr.bf16.mxu0 0
        %2135 = vmatpush1.bf16.msra.mxu0 %v2112
        %2136 = vmatprep.subr.bf16.mxu0 0
        %2137 = vmatpush1.bf16.msra.mxu0 %v2113
        %2138 = vmatprep.subr.bf16.mxu0 0
        %2139 = vmatpush1.bf16.msra.mxu0 0
        %2140 = vmatprep.subr.bf16.mxu0 0
        %2141 = vmatpush1.bf16.msra.mxu0 0
        %2142 = vmatprep.subr.bf16.mxu0 0
        %2143 = vmatpush1.bf16.msra.mxu0 0
        %2144 = vmatprep.subr.bf16.mxu0 0
        %2145 = vmatpush1.bf16.msra.mxu0 0
        %2146 = vmatprep.subr.bf16.mxu0 0
        %2147 = vmatpush1.bf16.msra.mxu0 0
        %2148 = vmatprep.subr.bf16.mxu0 0
        %2149 = vmatpush1.bf16.msra.mxu0 0
        %2150 = vmatprep.subr.bf16.mxu0 0
        %2151 = vmatpush1.bf16.msra.mxu0 0
        %2152 = vmatprep.subr.bf16.mxu0 0
        %2153 = vmatpush1.bf16.msra.mxu0 0
        %2154 = vmatprep.mubr.bf16.mxu0 0
        %2155 = vmatmul.mubr.bf16.gmra.mrb[0].mxu0 %v2072
        %v2156 = vpop.f32.mrb[0].mxu0
        %v2157 = vadd.f32 0.0, %v2156
        %v2158 = vpop.f32.mrb[0].mxu0
        %v2159 = vpop.f32.mrb[0].mxu0
        %v2160 = vpop.f32.mrb[0].mxu0
        %2161 = vdwg.mxu0
        %v2162 = vadd.f32 %v2054, %v2157
        %v2163 = vld [vmem:[#allocation2] sm:$0x3]
        %v2164 = vadd.f32 %v2163, %v2162
        %2165 = vst [vmem:[#allocation2] sm:$0x3] %v2164
        %p2166 = scmp.eq.s32.totalorder %s19, 3
        // Predicated region
        $region61: #{img_encoder_forward.1} parent=39 // pred_check
          %p2167 = pneg %p2166
        $region62: #{img_encoder_forward.1} parent=39 // pred_check_branch
          %2169 = sbr.rel (%p2167) target = $region64
        $region63: #{img_encoder_forward.1} parent=39 // pred_region
          %v2170 = vld [vmem:[#allocation2] sm:$0x3]
          %v2171 = vld [vmem:[#allocation9] sm:$0x1]
          %v2173 = vlaneseq
          %v2174 = vshrl.u32 %v2173, 7
          %v2175 = vsub.s32 0, %v2174
          %v2176 = vrot.slane %v2171, %v2175
          %v2178 = vadd.f32 %v2170, %v2176
          %v2179 = vmul.f32 %v2178, %v2178
          %vm2180 = vcmask 1041408
          %v2181 = vsel %vm2180, %v2179, 0.0
          %2182 = vadd.xlane.f32.xlu0 %v2181
          %v2183 = vpop.xlane.xlu0 %2182
          %v2184 = vrsqrt.pop %v2183
          %v2185 = vmul.f32 %v2178, %v2184
          %2186 = vst [vmem:[#allocation10] sm:$0x3] %v2185
        $region64: #{img_encoder_forward.1} parent=39 // pred_fallthru
          _
        // Predicated region
        $region65: #{img_encoder_forward.1} parent=39 // pred_check
          %p2187 = pneg %p147
        $region66: #{img_encoder_forward.1} parent=39 // pred_check_branch
          %2189 = sbr.rel (%p2187) target = $region68
        $region67: #{img_encoder_forward.1} parent=39 // pred_region
          %s2191 = ssub.s32 32, 32
          %2192 = vsyncadd [#allocation5], %s2191
          %s2194 = sshll.u32 [#allocation10], 4
          %s2195 = int_to_ptr.vmem [resolvable:$true] %s2194
          %2197 = dma.vmem_to_hbm [thread:$0]  %s2195, 32, %s5, [#allocation5]
        $region68: #{img_encoder_forward.1} parent=39 // pred_fallthru
          _
        // Predicated region
        $region69: #{img_encoder_forward.1} parent=39 // pred_check
          %p2198 = pneg %p147
        $region70: #{img_encoder_forward.1} parent=39 // pred_check_branch
          %2200 = sbr.rel (%p2198) target = $region72
        $region71: #{img_encoder_forward.1} parent=39 // pred_region
          %2201 = dma.done [#allocation5], 32
        $region72: #{img_encoder_forward.1} parent=39 // pred_fallthru
          _
      $region40: #{img_encoder_forward.1} parent=5 // pred_fallthru
        _
      %p2202 = scmp.le.s32.totalorder 2, %s14
      // Predicated region
      $region73: #{img_encoder_forward.1} parent=5 // pred_check
        %p2203 = pneg %p2202
      $region74: #{img_encoder_forward.1} parent=5 // pred_check_branch
        %2205 = sbr.rel (%p2203) target = $region76
      $region75: #{img_encoder_forward.1} parent=5 // pred_region
        %s2206 = ssub.s32 %s14, 2
      $region76: #{img_encoder_forward.1} parent=5 // pred_fallthru
        _
    $region6: #{img_encoder_forward.1} parent=1 // loop_footer
      %s18 = sadd.s32 1, %s14
    $region7: #{img_encoder_forward.1} parent=1 // loop_footer_branch
      %13 = sbr.rel target = $region3
    $region8: #{img_encoder_forward.1} parent=1 // loop_exit
      _
    %2207 = vsyncpa [#allocation4], 1
    %s2208 = scalar_lea.sflag [#allocation4], 1
    %2209 = vsyncpa %s2208, 1
    %2210 = vsyncpa [#allocation7], 1
    %2211 = vsyncpa [#allocation5], 1
    %s2212 = scalar_lea.sflag [#allocation5], 1
    %2213 = vsyncpa %s2212, 1

</llo_original>
